<compile_context>
chip_gen: v5e
topology: v5e:2x2
jax: 0.10.0
libtpu: 0.0.40
codegen_flags: <defaults>
</compile_context>

<pallas_src>
import math

import jax
import jax.numpy as jnp
from jax.experimental import pallas as pl
from jax.experimental.pallas import tpu as pltpu

# ----------------------------- model config ---------------------------------
VOCAB_LEN = 16
N_SPECIAL = 2
VOCAB_TOTAL = VOCAB_LEN + N_SPECIAL
EMBED = 32          # embed_size
DEPTH = 2           # number of encoder layers
NHEAD = 4
HEAD_DIM = EMBED // NHEAD
FFN = 256           # dim_feedforward
LN_EPS = 1e-5
NEG = -1e9

BATCH = 2
SEQ = 8
F32 = jnp.float32


# ----------------------------- Pallas kernel --------------------------------
def _layernorm(x, gamma, beta):
    mu = jnp.mean(x, axis=-1, keepdims=True)
    var = jnp.mean((x - mu) ** 2, axis=-1, keepdims=True)
    return (x - mu) * jax.lax.rsqrt(var + LN_EPS) * gamma + beta


def _softmax_rows(s):
    s = s - jnp.max(s, axis=-1, keepdims=True)
    p = jnp.exp(s)
    return p * pl.reciprocal(jnp.sum(p, axis=-1, keepdims=True), approx=True)


def _dot_nt(a, b):
    # a: (m, k), b: (n, k) -> (m, n); contraction on the last dim of both
    # (no explicit transpose op — the MXU handles operand orientation).
    return jax.lax.dot_general(
        a, b, dimension_numbers=(((1,), (1,)), ((), ())),
        preferred_element_type=F32)


def fused_encoder_kernel(
    tokrow_ref,   # (1, B*S)    int32 token ids (lane layout, for pad mask)
    tokcol_ref,   # (B*S, 1)    int32 token ids (sublane layout, for one-hot)
    embtbl_ref,   # (V, E)      embedding table
    pe_ref,       # (B*S, E)    positional-encoding table tiled over batch
    blockb_ref,   # (B*S, B*S)  block-diagonal bias (0 / -1e9), constant
    qblockb_ref,  # (B, B*S)    same bias restricted to query rows {0, S, ...}
    wqkv_ref,     # (D, E, 3E)
    bqkv_ref,     # (D, 1, 3E)
    wo_ref,       # (D, E, E)
    bo_ref,       # (D, 1, E)
    g1_ref,       # (D, 1, E)
    b1_ref,       # (D, 1, E)
    wf1_ref,      # (D, E, FFN)
    bf1_ref,      # (D, 1, FFN)
    wf2_ref,      # (D, FFN, E)
    bf2_ref,      # (D, 1, E)
    g2_ref,       # (D, 1, E)
    b2_ref,       # (D, 1, E)
    o_ref,        # (B, E)      == encoder_output[:, 0, :]
):
    B, S, E, HD = BATCH, SEQ, EMBED, HEAD_DIM
    N = B * S
    scale = 1.0 / math.sqrt(HD)

    # Key-padding additive bias (per flattened key column) + block-diag mask.
    pad_bias = jnp.where(tokrow_ref[...] >= VOCAB_LEN, NEG, 0.0).astype(F32)
    attn_bias = blockb_ref[...] + pad_bias          # (N, N)
    q0_bias = qblockb_ref[...] + pad_bias           # (B, N)

    # Embedding lookup as an exact one-hot matmul, + positional encoding.
    vid = jax.lax.broadcasted_iota(jnp.int32, (N, VOCAB_TOTAL), 1)
    onehot = (vid == tokcol_ref[...]).astype(F32)                   # (N, V)
    x = jnp.dot(onehot, embtbl_ref[...],
                preferred_element_type=F32) + pe_ref[...]           # (N, E)

    def mha(qkv, q_side, bias, d):
        """Multi-head attention. qkv: (N, 3E) for keys/values; q_side: rows
        whose queries are computed; Wo folded into the per-head loop."""
        wo = wo_ref[d]
        acc = None
        for h in range(NHEAD):                                      # static
            q = q_side[:, h * HD:(h + 1) * HD]                      # (nq, HD)
            k = qkv[:, E + h * HD:E + (h + 1) * HD]                 # (N, HD)
            v = qkv[:, 2 * E + h * HD:2 * E + (h + 1) * HD]         # (N, HD)
            s = _dot_nt(q, k) * scale + bias                        # (nq, N)
            p = _softmax_rows(s)
            pv = jnp.dot(p, v, preferred_element_type=F32)          # (nq, HD)
            # HD-row (sublane-aligned) slice of Wo; summing over heads replaces
            # the lane-axis concatenate + separate output-projection matmul.
            part = jnp.dot(pv, wo[h * HD:(h + 1) * HD, :],
                           preferred_element_type=F32)              # (nq, E)
            acc = part if acc is None else acc + part
        return acc + bo_ref[d]

    def ffn_ln(x_res, attn, d):
        h1 = _layernorm(x_res + attn, g1_ref[d], b1_ref[d])
        ff = jnp.dot(h1, wf1_ref[d], preferred_element_type=F32) + bf1_ref[d]
        ff = jnp.maximum(ff, 0.0)
        ff = jnp.dot(ff, wf2_ref[d], preferred_element_type=F32) + bf2_ref[d]
        return _layernorm(h1 + ff, g2_ref[d], b2_ref[d])

    # All layers except the last run on every (B*S) row.
    h = x
    for d in range(DEPTH - 1):                                      # static
        qkv = jnp.dot(h, wqkv_ref[d], preferred_element_type=F32) + bqkv_ref[d]
        attn = mha(qkv, qkv, attn_bias, d)
        h = ffn_ln(h, attn, d)

    # Final layer: only row 0 of each batch element is consumed downstream, so
    # queries / residual / layernorms / FFN are restricted to those rows.
    d = DEPTH - 1
    qkv = jnp.dot(h, wqkv_ref[d], preferred_element_type=F32) + bqkv_ref[d]
    q_rows = jnp.concatenate([qkv[b * S:b * S + 1, :] for b in range(B)], axis=0)
    x_rows = jnp.concatenate([h[b * S:b * S + 1, :] for b in range(B)], axis=0)
    attn = mha(qkv, q_rows, q0_bias, d)
    o_ref[...] = ffn_ln(x_rows, attn, d)                            # (B, E)


def fused_transformer_encoder(tok_row, tok_col, emb_tbl, pe2d,
                              block_bias, qblock_bias, stacked):
    def full_spec(shape):
        nd = len(shape)
        return pl.BlockSpec(shape, lambda i, nd=nd: (0,) * nd)

    order = ["wqkv", "bqkv", "wo", "bo", "g1", "b1",
             "wf1", "bf1", "wf2", "bf2", "g2", "b2"]
    weights = [stacked[k] for k in order]
    data = [tok_row, tok_col, emb_tbl, pe2d, block_bias, qblock_bias]
    in_specs = [full_spec(a.shape) for a in data + weights]

    return pl.pallas_call(
        fused_encoder_kernel,
        out_shape=jax.ShapeDtypeStruct((BATCH, EMBED), jnp.float32),
        grid=(1,),                       # single program: no per-step overhead
        in_specs=in_specs,
        out_specs=full_spec((BATCH, EMBED)),
        compiler_params=pltpu.CompilerParams(
            dimension_semantics=("arbitrary",)),
    )(*data, *weights)


# ----------------------------- plain-JAX glue --------------------------------
def positional_encoding(seq_len, embed_size):
    position = jnp.arange(seq_len, dtype=jnp.float32)[:, None]
    div_term = jnp.exp(jnp.arange(0, embed_size, 2, dtype=jnp.float32)
                       * (-math.log(10000.0) / embed_size))
    enc = jnp.zeros((seq_len, embed_size), dtype=jnp.float32)
    enc = enc.at[:, 0::2].set(jnp.sin(position * div_term))
    enc = enc.at[:, 1::2].set(jnp.cos(position * div_term))
    return enc


def stack_layer_params(layers):
    keys = ["wqkv", "bqkv", "wo", "bo", "g1", "b1",
            "wf1", "bf1", "wf2", "bf2", "g2", "b2"]
    return {k: jnp.stack([l[k] for l in layers], axis=0) for k in keys}


def init_params(key):
    """Deterministic synthetic parameters (not a checkpoint load)."""
    keys = jax.random.split(key, 2 + DEPTH)
    params = {
        "embedding": 0.1 * jax.random.normal(
            keys[0], (VOCAB_TOTAL, EMBED), jnp.float32),
        "layers": [],
    }
    for d in range(DEPTH):
        k = jax.random.split(keys[2 + d], 8)
        s_e = 1.0 / math.sqrt(EMBED)
        s_f = 1.0 / math.sqrt(FFN)
        layer = {
            "wqkv": s_e * jax.random.normal(k[0], (EMBED, 3 * EMBED), jnp.float32),
            "bqkv": 0.01 * jax.random.normal(k[1], (1, 3 * EMBED), jnp.float32),
            "wo":   s_e * jax.random.normal(k[2], (EMBED, EMBED), jnp.float32),
            "bo":   0.01 * jax.random.normal(k[3], (1, EMBED), jnp.float32),
            "g1":   jnp.ones((1, EMBED), jnp.float32),
            "b1":   jnp.zeros((1, EMBED), jnp.float32),
            "wf1":  s_e * jax.random.normal(k[4], (EMBED, FFN), jnp.float32),
            "bf1":  0.01 * jax.random.normal(k[5], (1, FFN), jnp.float32),
            "wf2":  s_f * jax.random.normal(k[6], (FFN, EMBED), jnp.float32),
            "bf2":  0.01 * jax.random.normal(k[7], (1, EMBED), jnp.float32),
            "g2":   jnp.ones((1, EMBED), jnp.float32),
            "b2":   jnp.zeros((1, EMBED), jnp.float32),
        }
        params["layers"].append(layer)
    return params


@jax.jit
def transformer_forward(params, tokens):
    """tokens: (B, S) int32.  Returns (B, E) = encoder(emb)[:, 0, :]."""
    B, S = tokens.shape
    N = B * S
    tokens = tokens.astype(jnp.int32)
    tok_row = tokens.reshape(1, N)                 # lane layout (pad mask)
    tok_col = tokens.reshape(N, 1)                 # sublane layout (one-hot)
    pe2d = jnp.tile(positional_encoding(S, EMBED), (B, 1))     # (N, E) const
    batch_id = jnp.arange(N, dtype=jnp.int32) // S
    block_bias = jnp.where(batch_id[:, None] == batch_id[None, :],
                           0.0, NEG).astype(jnp.float32)       # (N, N) const
    qblock_bias = block_bias[0::S, :]                          # (B, N) const
    stacked = stack_layer_params(params["layers"])
    return fused_transformer_encoder(tok_row, tok_col,
                                     params["embedding"].astype(jnp.float32),
                                     pe2d, block_bias, qblock_bias, stacked)


# ----------------------------- pure-JAX reference ----------------------------
def _ref_layer(x, mask_bias, p):
    qkv = x @ p["wqkv"] + p["bqkv"]
    q, k, v = jnp.split(qkv, 3, axis=-1)
    B, S, E = x.shape

    def split_heads(t):
        return t.reshape(B, S, NHEAD, HEAD_DIM).transpose(0, 2, 1, 3)

    qh, kh, vh = split_heads(q), split_heads(k), split_heads(v)
    s = jnp.einsum("bhqd,bhkd->bhqk", qh, kh) / math.sqrt(HEAD_DIM)
    s = s + mask_bias[:, :, None, :]
    p_attn = jax.nn.softmax(s, axis=-1)
    a = jnp.einsum("bhqk,bhkd->bhqd", p_attn, vh)
    a = a.transpose(0, 2, 1, 3).reshape(B, S, E)
    a = a @ p["wo"] + p["bo"]

    def ln(t, g, b):
        mu = t.mean(-1, keepdims=True)
        var = ((t - mu) ** 2).mean(-1, keepdims=True)
        return (t - mu) / jnp.sqrt(var + LN_EPS) * g + b

    h1 = ln(x + a, p["g1"], p["b1"])
    ff = jnp.maximum(h1 @ p["wf1"] + p["bf1"], 0.0) @ p["wf2"] + p["bf2"]
    return ln(h1 + ff, p["g2"], p["b2"])


def transformer_forward_ref(params, tokens):
    B, S = tokens.shape
    emb = params["embedding"][tokens] + positional_encoding(S, EMBED)[None]
    mask_bias = jnp.where(tokens >= VOCAB_LEN, NEG, 0.0)[:, None, :]
    h = emb.astype(jnp.float32)
    for layer in params["layers"]:
        h = _ref_layer(h, mask_bias, layer)
    return h[:, 0, :]


# --------------------------------- main --------------------------------------
if __name__ == "__main__":
    key = jax.random.PRNGKey(0)
    kp, kx = jax.random.split(key)
    params = init_params(kp)

    # tokens in [0, vocab_len + n_special); values >= vocab_len are "special"
    # and become masked keys.  Force position 0 to a real token so no row is
    # fully masked.
    tokens = jax.random.randint(kx, (BATCH, SEQ), 0, VOCAB_TOTAL,
                                dtype=jnp.int32)
    tokens = tokens.at[:, 0].set(1)

    out = transformer_forward(params, tokens)
    out = jax.block_until_ready(out)

    ref = transformer_forward_ref(params, tokens)
    assert out.shape == (BATCH, EMBED)
    assert bool(jnp.all(jnp.isfinite(out)))
    assert bool(jnp.allclose(out, ref, atol=1e-2, rtol=1e-2)), (
        f"max diff {float(jnp.max(jnp.abs(out - ref)))}")
    print("KERNEL_OK")
</pallas_src>

<mosaic_0001>
module attributes {stable_mosaic.version = 11 : i64} {
  func.func @fused_encoder_kernel(%arg0: i32, %arg1: memref<1x16xi32, #tpu.memory_space<vmem>>, %arg2: memref<16x1xi32, #tpu.memory_space<vmem>>, %arg3: memref<18x32xf32, #tpu.memory_space<vmem>>, %arg4: memref<16x32xf32, #tpu.memory_space<vmem>>, %arg5: memref<16x16xf32, #tpu.memory_space<vmem>>, %arg6: memref<2x16xf32, #tpu.memory_space<vmem>>, %arg7: memref<2x32x96xf32, #tpu.memory_space<vmem>>, %arg8: memref<2x1x96xf32, #tpu.memory_space<vmem>>, %arg9: memref<2x32x32xf32, #tpu.memory_space<vmem>>, %arg10: memref<2x1x32xf32, #tpu.memory_space<vmem>>, %arg11: memref<2x1x32xf32, #tpu.memory_space<vmem>>, %arg12: memref<2x1x32xf32, #tpu.memory_space<vmem>>, %arg13: memref<2x32x256xf32, #tpu.memory_space<vmem>>, %arg14: memref<2x1x256xf32, #tpu.memory_space<vmem>>, %arg15: memref<2x256x32xf32, #tpu.memory_space<vmem>>, %arg16: memref<2x1x32xf32, #tpu.memory_space<vmem>>, %arg17: memref<2x1x32xf32, #tpu.memory_space<vmem>>, %arg18: memref<2x1x32xf32, #tpu.memory_space<vmem>>, %arg19: memref<2x32xf32, #tpu.memory_space<vmem>>) attributes {dimension_semantics = [#tpu.dimension_semantics<arbitrary>], iteration_bounds = array<i64: 1>, scalar_prefetch = 0 : i64, scratch_operands = 0 : i64, tpu.core_type = #tpu.core_type<tc>, window_params = [{pipeline_mode = #tpu.pipeline_mode<synchronous>, transform_indices = @transform_0, window_bounds = array<i64: 1, 16>}, {pipeline_mode = #tpu.pipeline_mode<synchronous>, transform_indices = @transform_1, window_bounds = array<i64: 16, 1>}, {pipeline_mode = #tpu.pipeline_mode<synchronous>, transform_indices = @transform_2, window_bounds = array<i64: 18, 32>}, {pipeline_mode = #tpu.pipeline_mode<synchronous>, transform_indices = @transform_3, window_bounds = array<i64: 16, 32>}, {pipeline_mode = #tpu.pipeline_mode<synchronous>, transform_indices = @transform_4, window_bounds = array<i64: 16, 16>}, {pipeline_mode = #tpu.pipeline_mode<synchronous>, transform_indices = @transform_5, window_bounds = array<i64: 2, 16>}, {pipeline_mode = #tpu.pipeline_mode<synchronous>, transform_indices = @transform_6, window_bounds = array<i64: 2, 32, 96>}, {pipeline_mode = #tpu.pipeline_mode<synchronous>, transform_indices = @transform_7, window_bounds = array<i64: 2, 1, 96>}, {pipeline_mode = #tpu.pipeline_mode<synchronous>, transform_indices = @transform_8, window_bounds = array<i64: 2, 32, 32>}, {pipeline_mode = #tpu.pipeline_mode<synchronous>, transform_indices = @transform_9, window_bounds = array<i64: 2, 1, 32>}, {pipeline_mode = #tpu.pipeline_mode<synchronous>, transform_indices = @transform_10, window_bounds = array<i64: 2, 1, 32>}, {pipeline_mode = #tpu.pipeline_mode<synchronous>, transform_indices = @transform_11, window_bounds = array<i64: 2, 1, 32>}, {pipeline_mode = #tpu.pipeline_mode<synchronous>, transform_indices = @transform_12, window_bounds = array<i64: 2, 32, 256>}, {pipeline_mode = #tpu.pipeline_mode<synchronous>, transform_indices = @transform_13, window_bounds = array<i64: 2, 1, 256>}, {pipeline_mode = #tpu.pipeline_mode<synchronous>, transform_indices = @transform_14, window_bounds = array<i64: 2, 256, 32>}, {pipeline_mode = #tpu.pipeline_mode<synchronous>, transform_indices = @transform_15, window_bounds = array<i64: 2, 1, 32>}, {pipeline_mode = #tpu.pipeline_mode<synchronous>, transform_indices = @transform_16, window_bounds = array<i64: 2, 1, 32>}, {pipeline_mode = #tpu.pipeline_mode<synchronous>, transform_indices = @transform_17, window_bounds = array<i64: 2, 1, 32>}, {pipeline_mode = #tpu.pipeline_mode<synchronous>, transform_indices = @transform_18, window_bounds = array<i64: 2, 32>}]} {
    %c0 = arith.constant 0 : index
    %c0_0 = arith.constant 0 : index
    %0 = vector.load %arg1[%c0, %c0_0] : memref<1x16xi32, #tpu.memory_space<vmem>>, vector<1x16xi32>
    %c16_i32 = arith.constant 16 : i32
    %1 = vector.broadcast %c16_i32 : i32 to vector<1x16xi32>
    %2 = arith.cmpi sge, %0, %1 : vector<1x16xi32>
    %cst = arith.constant -1.000000e+09 : f32
    %cst_1 = arith.constant 0.000000e+00 : f32
    %3 = vector.broadcast %cst : f32 to vector<1x16xf32>
    %4 = vector.broadcast %cst_1 : f32 to vector<1x16xf32>
    %5 = arith.select %2, %3, %4 : vector<1x16xi1>, vector<1x16xf32>
    %c0_2 = arith.constant 0 : index
    %c0_3 = arith.constant 0 : index
    %6 = vector.load %arg5[%c0_2, %c0_3] : memref<16x16xf32, #tpu.memory_space<vmem>>, vector<16x16xf32>
    %7 = vector.broadcast %5 : vector<1x16xf32> to vector<16x16xf32>
    %8 = arith.addf %6, %7 : vector<16x16xf32>
    %c0_4 = arith.constant 0 : index
    %c0_5 = arith.constant 0 : index
    %9 = vector.load %arg6[%c0_4, %c0_5] : memref<2x16xf32, #tpu.memory_space<vmem>>, vector<2x16xf32>
    %10 = vector.broadcast %5 : vector<1x16xf32> to vector<2x16xf32>
    %11 = arith.addf %9, %10 : vector<2x16xf32>
    %12 = tpu.iota {dimensions = array<i32: 1>} : vector<16x18xi32>
    %c0_6 = arith.constant 0 : index
    %c0_7 = arith.constant 0 : index
    %13 = vector.load %arg2[%c0_6, %c0_7] : memref<16x1xi32, #tpu.memory_space<vmem>>, vector<16x1xi32>
    %14 = vector.broadcast %13 : vector<16x1xi32> to vector<16x18xi32>
    %15 = arith.cmpi eq, %12, %14 : vector<16x18xi32>
    %16 = arith.extui %15 : vector<16x18xi1> to vector<16x18xi32>
    %17 = arith.sitofp %16 : vector<16x18xi32> to vector<16x18xf32>
    %c0_8 = arith.constant 0 : index
    %c0_9 = arith.constant 0 : index
    %18 = vector.load %arg3[%c0_8, %c0_9] : memref<18x32xf32, #tpu.memory_space<vmem>>, vector<18x32xf32>
    %cst_10 = arith.constant dense<0.000000e+00> : vector<16x32xf32>
    %19 = tpu.matmul %17, %18, %cst_10 {dimension_numbers = #tpu.dot_dimension_numbers<[1], [0], [0], [1], [0, 0, 1, 1], [], []>} : vector<16x18xf32>, vector<18x32xf32>, vector<16x32xf32> -> vector<16x32xf32>
    %c0_11 = arith.constant 0 : index
    %c0_12 = arith.constant 0 : index
    %20 = vector.load %arg4[%c0_11, %c0_12] : memref<16x32xf32, #tpu.memory_space<vmem>>, vector<16x32xf32>
    %21 = arith.addf %19, %20 : vector<16x32xf32>
    %c0_13 = arith.constant 0 : index
    %c0_14 = arith.constant 0 : index
    %c0_15 = arith.constant 0 : index
    %22 = vector.load %arg7[%c0_13, %c0_14, %c0_15] : memref<2x32x96xf32, #tpu.memory_space<vmem>>, vector<1x32x96xf32>
    %23 = vector.shape_cast %22 : vector<1x32x96xf32> to vector<32x96xf32>
    %cst_16 = arith.constant dense<0.000000e+00> : vector<16x96xf32>
    %24 = tpu.matmul %21, %23, %cst_16 {dimension_numbers = #tpu.dot_dimension_numbers<[1], [0], [0], [1], [0, 0, 1, 1], [], []>} : vector<16x32xf32>, vector<32x96xf32>, vector<16x96xf32> -> vector<16x96xf32>
    %c0_17 = arith.constant 0 : index
    %c0_18 = arith.constant 0 : index
    %c0_19 = arith.constant 0 : index
    %25 = vector.load %arg8[%c0_17, %c0_18, %c0_19] : memref<2x1x96xf32, #tpu.memory_space<vmem>>, vector<1x1x96xf32>
    %26 = vector.shape_cast %25 : vector<1x1x96xf32> to vector<1x96xf32>
    %27 = vector.broadcast %26 : vector<1x96xf32> to vector<16x96xf32>
    %28 = arith.addf %24, %27 : vector<16x96xf32>
    %c0_20 = arith.constant 0 : index
    %c0_21 = arith.constant 0 : index
    %c0_22 = arith.constant 0 : index
    %29 = vector.load %arg9[%c0_20, %c0_21, %c0_22] : memref<2x32x32xf32, #tpu.memory_space<vmem>>, vector<1x32x32xf32>
    %30 = vector.shape_cast %29 : vector<1x32x32xf32> to vector<32x32xf32>
    %31 = vector.extract_strided_slice %28 {offsets = [0, 0], sizes = [16, 8], strides = [1, 1]} : vector<16x96xf32> to vector<16x8xf32>
    %32 = vector.extract_strided_slice %28 {offsets = [0, 32], sizes = [16, 8], strides = [1, 1]} : vector<16x96xf32> to vector<16x8xf32>
    %33 = vector.extract_strided_slice %28 {offsets = [0, 64], sizes = [16, 8], strides = [1, 1]} : vector<16x96xf32> to vector<16x8xf32>
    %cst_23 = arith.constant dense<0.000000e+00> : vector<16x16xf32>
    %34 = tpu.matmul %31, %32, %cst_23 {dimension_numbers = #tpu.dot_dimension_numbers<[1], [1], [0], [0], [0, 0, 1, 0], [], []>} : vector<16x8xf32>, vector<16x8xf32>, vector<16x16xf32> -> vector<16x16xf32>
    %cst_24 = arith.constant 0.353553385 : f32
    %35 = vector.broadcast %cst_24 : f32 to vector<16x16xf32>
    %36 = arith.mulf %34, %35 : vector<16x16xf32>
    %37 = arith.addf %36, %8 : vector<16x16xf32>
    %cst_25 = arith.constant dense<0xFF800000> : vector<16xf32>
    %38 = vector.multi_reduction <maximumf>, %37, %cst_25 [1] : vector<16x16xf32> to vector<16xf32>
    %39 = vector.shape_cast %38 : vector<16xf32> to vector<16x1xf32>
    %40 = vector.broadcast %39 : vector<16x1xf32> to vector<16x16xf32>
    %41 = arith.subf %37, %40 : vector<16x16xf32>
    %42 = math.exp %41 : vector<16x16xf32>
    %cst_26 = arith.constant dense<0.000000e+00> : vector<16xf32>
    %43 = vector.multi_reduction <add>, %42, %cst_26 [1] : vector<16x16xf32> to vector<16xf32>
    %44 = vector.shape_cast %43 : vector<16xf32> to vector<16x1xf32>
    %45 = tpu.reciprocal %44 {approx = true} : vector<16x1xf32> -> vector<16x1xf32>
    %46 = vector.broadcast %45 : vector<16x1xf32> to vector<16x16xf32>
    %47 = arith.mulf %42, %46 : vector<16x16xf32>
    %cst_27 = arith.constant dense<0.000000e+00> : vector<16x8xf32>
    %48 = tpu.matmul %47, %33, %cst_27 {dimension_numbers = #tpu.dot_dimension_numbers<[1], [0], [0], [1], [0, 0, 1, 1], [], []>} : vector<16x16xf32>, vector<16x8xf32>, vector<16x8xf32> -> vector<16x8xf32>
    %49 = vector.extract_strided_slice %30 {offsets = [0, 0], sizes = [8, 32], strides = [1, 1]} : vector<32x32xf32> to vector<8x32xf32>
    %cst_28 = arith.constant dense<0.000000e+00> : vector<16x32xf32>
    %50 = tpu.matmul %48, %49, %cst_28 {dimension_numbers = #tpu.dot_dimension_numbers<[1], [0], [0], [1], [0, 0, 1, 1], [], []>} : vector<16x8xf32>, vector<8x32xf32>, vector<16x32xf32> -> vector<16x32xf32>
    %51 = vector.extract_strided_slice %28 {offsets = [0, 8], sizes = [16, 8], strides = [1, 1]} : vector<16x96xf32> to vector<16x8xf32>
    %52 = vector.extract_strided_slice %28 {offsets = [0, 40], sizes = [16, 8], strides = [1, 1]} : vector<16x96xf32> to vector<16x8xf32>
    %53 = vector.extract_strided_slice %28 {offsets = [0, 72], sizes = [16, 8], strides = [1, 1]} : vector<16x96xf32> to vector<16x8xf32>
    %cst_29 = arith.constant dense<0.000000e+00> : vector<16x16xf32>
    %54 = tpu.matmul %51, %52, %cst_29 {dimension_numbers = #tpu.dot_dimension_numbers<[1], [1], [0], [0], [0, 0, 1, 0], [], []>} : vector<16x8xf32>, vector<16x8xf32>, vector<16x16xf32> -> vector<16x16xf32>
    %cst_30 = arith.constant 0.353553385 : f32
    %55 = vector.broadcast %cst_30 : f32 to vector<16x16xf32>
    %56 = arith.mulf %54, %55 : vector<16x16xf32>
    %57 = arith.addf %56, %8 : vector<16x16xf32>
    %cst_31 = arith.constant dense<0xFF800000> : vector<16xf32>
    %58 = vector.multi_reduction <maximumf>, %57, %cst_31 [1] : vector<16x16xf32> to vector<16xf32>
    %59 = vector.shape_cast %58 : vector<16xf32> to vector<16x1xf32>
    %60 = vector.broadcast %59 : vector<16x1xf32> to vector<16x16xf32>
    %61 = arith.subf %57, %60 : vector<16x16xf32>
    %62 = math.exp %61 : vector<16x16xf32>
    %cst_32 = arith.constant dense<0.000000e+00> : vector<16xf32>
    %63 = vector.multi_reduction <add>, %62, %cst_32 [1] : vector<16x16xf32> to vector<16xf32>
    %64 = vector.shape_cast %63 : vector<16xf32> to vector<16x1xf32>
    %65 = tpu.reciprocal %64 {approx = true} : vector<16x1xf32> -> vector<16x1xf32>
    %66 = vector.broadcast %65 : vector<16x1xf32> to vector<16x16xf32>
    %67 = arith.mulf %62, %66 : vector<16x16xf32>
    %cst_33 = arith.constant dense<0.000000e+00> : vector<16x8xf32>
    %68 = tpu.matmul %67, %53, %cst_33 {dimension_numbers = #tpu.dot_dimension_numbers<[1], [0], [0], [1], [0, 0, 1, 1], [], []>} : vector<16x16xf32>, vector<16x8xf32>, vector<16x8xf32> -> vector<16x8xf32>
    %69 = vector.extract_strided_slice %30 {offsets = [8, 0], sizes = [8, 32], strides = [1, 1]} : vector<32x32xf32> to vector<8x32xf32>
    %cst_34 = arith.constant dense<0.000000e+00> : vector<16x32xf32>
    %70 = tpu.matmul %68, %69, %cst_34 {dimension_numbers = #tpu.dot_dimension_numbers<[1], [0], [0], [1], [0, 0, 1, 1], [], []>} : vector<16x8xf32>, vector<8x32xf32>, vector<16x32xf32> -> vector<16x32xf32>
    %71 = arith.addf %50, %70 : vector<16x32xf32>
    %72 = vector.extract_strided_slice %28 {offsets = [0, 16], sizes = [16, 8], strides = [1, 1]} : vector<16x96xf32> to vector<16x8xf32>
    %73 = vector.extract_strided_slice %28 {offsets = [0, 48], sizes = [16, 8], strides = [1, 1]} : vector<16x96xf32> to vector<16x8xf32>
    %74 = vector.extract_strided_slice %28 {offsets = [0, 80], sizes = [16, 8], strides = [1, 1]} : vector<16x96xf32> to vector<16x8xf32>
    %cst_35 = arith.constant dense<0.000000e+00> : vector<16x16xf32>
    %75 = tpu.matmul %72, %73, %cst_35 {dimension_numbers = #tpu.dot_dimension_numbers<[1], [1], [0], [0], [0, 0, 1, 0], [], []>} : vector<16x8xf32>, vector<16x8xf32>, vector<16x16xf32> -> vector<16x16xf32>
    %cst_36 = arith.constant 0.353553385 : f32
    %76 = vector.broadcast %cst_36 : f32 to vector<16x16xf32>
    %77 = arith.mulf %75, %76 : vector<16x16xf32>
    %78 = arith.addf %77, %8 : vector<16x16xf32>
    %cst_37 = arith.constant dense<0xFF800000> : vector<16xf32>
    %79 = vector.multi_reduction <maximumf>, %78, %cst_37 [1] : vector<16x16xf32> to vector<16xf32>
    %80 = vector.shape_cast %79 : vector<16xf32> to vector<16x1xf32>
    %81 = vector.broadcast %80 : vector<16x1xf32> to vector<16x16xf32>
    %82 = arith.subf %78, %81 : vector<16x16xf32>
    %83 = math.exp %82 : vector<16x16xf32>
    %cst_38 = arith.constant dense<0.000000e+00> : vector<16xf32>
    %84 = vector.multi_reduction <add>, %83, %cst_38 [1] : vector<16x16xf32> to vector<16xf32>
    %85 = vector.shape_cast %84 : vector<16xf32> to vector<16x1xf32>
    %86 = tpu.reciprocal %85 {approx = true} : vector<16x1xf32> -> vector<16x1xf32>
    %87 = vector.broadcast %86 : vector<16x1xf32> to vector<16x16xf32>
    %88 = arith.mulf %83, %87 : vector<16x16xf32>
    %cst_39 = arith.constant dense<0.000000e+00> : vector<16x8xf32>
    %89 = tpu.matmul %88, %74, %cst_39 {dimension_numbers = #tpu.dot_dimension_numbers<[1], [0], [0], [1], [0, 0, 1, 1], [], []>} : vector<16x16xf32>, vector<16x8xf32>, vector<16x8xf32> -> vector<16x8xf32>
    %90 = vector.extract_strided_slice %30 {offsets = [16, 0], sizes = [8, 32], strides = [1, 1]} : vector<32x32xf32> to vector<8x32xf32>
    %cst_40 = arith.constant dense<0.000000e+00> : vector<16x32xf32>
    %91 = tpu.matmul %89, %90, %cst_40 {dimension_numbers = #tpu.dot_dimension_numbers<[1], [0], [0], [1], [0, 0, 1, 1], [], []>} : vector<16x8xf32>, vector<8x32xf32>, vector<16x32xf32> -> vector<16x32xf32>
    %92 = arith.addf %71, %91 : vector<16x32xf32>
    %93 = vector.extract_strided_slice %28 {offsets = [0, 24], sizes = [16, 8], strides = [1, 1]} : vector<16x96xf32> to vector<16x8xf32>
    %94 = vector.extract_strided_slice %28 {offsets = [0, 56], sizes = [16, 8], strides = [1, 1]} : vector<16x96xf32> to vector<16x8xf32>
    %95 = vector.extract_strided_slice %28 {offsets = [0, 88], sizes = [16, 8], strides = [1, 1]} : vector<16x96xf32> to vector<16x8xf32>
    %cst_41 = arith.constant dense<0.000000e+00> : vector<16x16xf32>
    %96 = tpu.matmul %93, %94, %cst_41 {dimension_numbers = #tpu.dot_dimension_numbers<[1], [1], [0], [0], [0, 0, 1, 0], [], []>} : vector<16x8xf32>, vector<16x8xf32>, vector<16x16xf32> -> vector<16x16xf32>
    %cst_42 = arith.constant 0.353553385 : f32
    %97 = vector.broadcast %cst_42 : f32 to vector<16x16xf32>
    %98 = arith.mulf %96, %97 : vector<16x16xf32>
    %99 = arith.addf %98, %8 : vector<16x16xf32>
    %cst_43 = arith.constant dense<0xFF800000> : vector<16xf32>
    %100 = vector.multi_reduction <maximumf>, %99, %cst_43 [1] : vector<16x16xf32> to vector<16xf32>
    %101 = vector.shape_cast %100 : vector<16xf32> to vector<16x1xf32>
    %102 = vector.broadcast %101 : vector<16x1xf32> to vector<16x16xf32>
    %103 = arith.subf %99, %102 : vector<16x16xf32>
    %104 = math.exp %103 : vector<16x16xf32>
    %cst_44 = arith.constant dense<0.000000e+00> : vector<16xf32>
    %105 = vector.multi_reduction <add>, %104, %cst_44 [1] : vector<16x16xf32> to vector<16xf32>
    %106 = vector.shape_cast %105 : vector<16xf32> to vector<16x1xf32>
    %107 = tpu.reciprocal %106 {approx = true} : vector<16x1xf32> -> vector<16x1xf32>
    %108 = vector.broadcast %107 : vector<16x1xf32> to vector<16x16xf32>
    %109 = arith.mulf %104, %108 : vector<16x16xf32>
    %cst_45 = arith.constant dense<0.000000e+00> : vector<16x8xf32>
    %110 = tpu.matmul %109, %95, %cst_45 {dimension_numbers = #tpu.dot_dimension_numbers<[1], [0], [0], [1], [0, 0, 1, 1], [], []>} : vector<16x16xf32>, vector<16x8xf32>, vector<16x8xf32> -> vector<16x8xf32>
    %111 = vector.extract_strided_slice %30 {offsets = [24, 0], sizes = [8, 32], strides = [1, 1]} : vector<32x32xf32> to vector<8x32xf32>
    %cst_46 = arith.constant dense<0.000000e+00> : vector<16x32xf32>
    %112 = tpu.matmul %110, %111, %cst_46 {dimension_numbers = #tpu.dot_dimension_numbers<[1], [0], [0], [1], [0, 0, 1, 1], [], []>} : vector<16x8xf32>, vector<8x32xf32>, vector<16x32xf32> -> vector<16x32xf32>
    %113 = arith.addf %92, %112 : vector<16x32xf32>
    %c0_47 = arith.constant 0 : index
    %c0_48 = arith.constant 0 : index
    %c0_49 = arith.constant 0 : index
    %114 = vector.load %arg10[%c0_47, %c0_48, %c0_49] : memref<2x1x32xf32, #tpu.memory_space<vmem>>, vector<1x1x32xf32>
    %115 = vector.shape_cast %114 : vector<1x1x32xf32> to vector<1x32xf32>
    %116 = vector.broadcast %115 : vector<1x32xf32> to vector<16x32xf32>
    %117 = arith.addf %113, %116 : vector<16x32xf32>
    %118 = arith.addf %21, %117 : vector<16x32xf32>
    %c0_50 = arith.constant 0 : index
    %c0_51 = arith.constant 0 : index
    %c0_52 = arith.constant 0 : index
    %119 = vector.load %arg11[%c0_50, %c0_51, %c0_52] : memref<2x1x32xf32, #tpu.memory_space<vmem>>, vector<1x1x32xf32>
    %120 = vector.shape_cast %119 : vector<1x1x32xf32> to vector<1x32xf32>
    %c0_53 = arith.constant 0 : index
    %c0_54 = arith.constant 0 : index
    %c0_55 = arith.constant 0 : index
    %121 = vector.load %arg12[%c0_53, %c0_54, %c0_55] : memref<2x1x32xf32, #tpu.memory_space<vmem>>, vector<1x1x32xf32>
    %122 = vector.shape_cast %121 : vector<1x1x32xf32> to vector<1x32xf32>
    %cst_56 = arith.constant dense<0.000000e+00> : vector<16xf32>
    %123 = vector.multi_reduction <add>, %118, %cst_56 [1] : vector<16x32xf32> to vector<16xf32>
    %124 = vector.shape_cast %123 : vector<16xf32> to vector<16x1xf32>
    %cst_57 = arith.constant 3.200000e+01 : f32
    %125 = vector.broadcast %cst_57 : f32 to vector<16x1xf32>
    %126 = arith.divf %124, %125 : vector<16x1xf32>
    %127 = vector.broadcast %126 : vector<16x1xf32> to vector<16x32xf32>
    %128 = arith.subf %118, %127 : vector<16x32xf32>
    %129 = arith.mulf %128, %128 : vector<16x32xf32>
    %cst_58 = arith.constant dense<0.000000e+00> : vector<16xf32>
    %130 = vector.multi_reduction <add>, %129, %cst_58 [1] : vector<16x32xf32> to vector<16xf32>
    %131 = vector.shape_cast %130 : vector<16xf32> to vector<16x1xf32>
    %cst_59 = arith.constant 3.200000e+01 : f32
    %132 = vector.broadcast %cst_59 : f32 to vector<16x1xf32>
    %133 = arith.divf %131, %132 : vector<16x1xf32>
    %134 = vector.broadcast %126 : vector<16x1xf32> to vector<16x32xf32>
    %135 = arith.subf %118, %134 : vector<16x32xf32>
    %cst_60 = arith.constant 9.99999974E-6 : f32
    %136 = vector.broadcast %cst_60 : f32 to vector<16x1xf32>
    %137 = arith.addf %133, %136 : vector<16x1xf32>
    %138 = math.rsqrt %137 : vector<16x1xf32>
    %139 = vector.broadcast %138 : vector<16x1xf32> to vector<16x32xf32>
    %140 = arith.mulf %135, %139 : vector<16x32xf32>
    %141 = vector.broadcast %120 : vector<1x32xf32> to vector<16x32xf32>
    %142 = arith.mulf %140, %141 : vector<16x32xf32>
    %143 = vector.broadcast %122 : vector<1x32xf32> to vector<16x32xf32>
    %144 = arith.addf %142, %143 : vector<16x32xf32>
    %c0_61 = arith.constant 0 : index
    %c0_62 = arith.constant 0 : index
    %c0_63 = arith.constant 0 : index
    %145 = vector.load %arg13[%c0_61, %c0_62, %c0_63] : memref<2x32x256xf32, #tpu.memory_space<vmem>>, vector<1x32x256xf32>
    %146 = vector.shape_cast %145 : vector<1x32x256xf32> to vector<32x256xf32>
    %cst_64 = arith.constant dense<0.000000e+00> : vector<16x256xf32>
    %147 = tpu.matmul %144, %146, %cst_64 {dimension_numbers = #tpu.dot_dimension_numbers<[1], [0], [0], [1], [0, 0, 1, 1], [], []>} : vector<16x32xf32>, vector<32x256xf32>, vector<16x256xf32> -> vector<16x256xf32>
    %c0_65 = arith.constant 0 : index
    %c0_66 = arith.constant 0 : index
    %c0_67 = arith.constant 0 : index
    %148 = vector.load %arg14[%c0_65, %c0_66, %c0_67] : memref<2x1x256xf32, #tpu.memory_space<vmem>>, vector<1x1x256xf32>
    %149 = vector.shape_cast %148 : vector<1x1x256xf32> to vector<1x256xf32>
    %150 = vector.broadcast %149 : vector<1x256xf32> to vector<16x256xf32>
    %151 = arith.addf %147, %150 : vector<16x256xf32>
    %cst_68 = arith.constant 0.000000e+00 : f32
    %152 = vector.broadcast %cst_68 : f32 to vector<16x256xf32>
    %153 = arith.maximumf %151, %152 : vector<16x256xf32>
    %c0_69 = arith.constant 0 : index
    %c0_70 = arith.constant 0 : index
    %c0_71 = arith.constant 0 : index
    %154 = vector.load %arg15[%c0_69, %c0_70, %c0_71] : memref<2x256x32xf32, #tpu.memory_space<vmem>>, vector<1x256x32xf32>
    %155 = vector.shape_cast %154 : vector<1x256x32xf32> to vector<256x32xf32>
    %cst_72 = arith.constant dense<0.000000e+00> : vector<16x32xf32>
    %156 = tpu.matmul %153, %155, %cst_72 {dimension_numbers = #tpu.dot_dimension_numbers<[1], [0], [0], [1], [0, 0, 1, 1], [], []>} : vector<16x256xf32>, vector<256x32xf32>, vector<16x32xf32> -> vector<16x32xf32>
    %c0_73 = arith.constant 0 : index
    %c0_74 = arith.constant 0 : index
    %c0_75 = arith.constant 0 : index
    %157 = vector.load %arg16[%c0_73, %c0_74, %c0_75] : memref<2x1x32xf32, #tpu.memory_space<vmem>>, vector<1x1x32xf32>
    %158 = vector.shape_cast %157 : vector<1x1x32xf32> to vector<1x32xf32>
    %159 = vector.broadcast %158 : vector<1x32xf32> to vector<16x32xf32>
    %160 = arith.addf %156, %159 : vector<16x32xf32>
    %161 = arith.addf %144, %160 : vector<16x32xf32>
    %c0_76 = arith.constant 0 : index
    %c0_77 = arith.constant 0 : index
    %c0_78 = arith.constant 0 : index
    %162 = vector.load %arg17[%c0_76, %c0_77, %c0_78] : memref<2x1x32xf32, #tpu.memory_space<vmem>>, vector<1x1x32xf32>
    %163 = vector.shape_cast %162 : vector<1x1x32xf32> to vector<1x32xf32>
    %c0_79 = arith.constant 0 : index
    %c0_80 = arith.constant 0 : index
    %c0_81 = arith.constant 0 : index
    %164 = vector.load %arg18[%c0_79, %c0_80, %c0_81] : memref<2x1x32xf32, #tpu.memory_space<vmem>>, vector<1x1x32xf32>
    %165 = vector.shape_cast %164 : vector<1x1x32xf32> to vector<1x32xf32>
    %cst_82 = arith.constant dense<0.000000e+00> : vector<16xf32>
    %166 = vector.multi_reduction <add>, %161, %cst_82 [1] : vector<16x32xf32> to vector<16xf32>
    %167 = vector.shape_cast %166 : vector<16xf32> to vector<16x1xf32>
    %cst_83 = arith.constant 3.200000e+01 : f32
    %168 = vector.broadcast %cst_83 : f32 to vector<16x1xf32>
    %169 = arith.divf %167, %168 : vector<16x1xf32>
    %170 = vector.broadcast %169 : vector<16x1xf32> to vector<16x32xf32>
    %171 = arith.subf %161, %170 : vector<16x32xf32>
    %172 = arith.mulf %171, %171 : vector<16x32xf32>
    %cst_84 = arith.constant dense<0.000000e+00> : vector<16xf32>
    %173 = vector.multi_reduction <add>, %172, %cst_84 [1] : vector<16x32xf32> to vector<16xf32>
    %174 = vector.shape_cast %173 : vector<16xf32> to vector<16x1xf32>
    %cst_85 = arith.constant 3.200000e+01 : f32
    %175 = vector.broadcast %cst_85 : f32 to vector<16x1xf32>
    %176 = arith.divf %174, %175 : vector<16x1xf32>
    %177 = vector.broadcast %169 : vector<16x1xf32> to vector<16x32xf32>
    %178 = arith.subf %161, %177 : vector<16x32xf32>
    %cst_86 = arith.constant 9.99999974E-6 : f32
    %179 = vector.broadcast %cst_86 : f32 to vector<16x1xf32>
    %180 = arith.addf %176, %179 : vector<16x1xf32>
    %181 = math.rsqrt %180 : vector<16x1xf32>
    %182 = vector.broadcast %181 : vector<16x1xf32> to vector<16x32xf32>
    %183 = arith.mulf %178, %182 : vector<16x32xf32>
    %184 = vector.broadcast %163 : vector<1x32xf32> to vector<16x32xf32>
    %185 = arith.mulf %183, %184 : vector<16x32xf32>
    %186 = vector.broadcast %165 : vector<1x32xf32> to vector<16x32xf32>
    %187 = arith.addf %185, %186 : vector<16x32xf32>
    %c1 = arith.constant 1 : index
    %c0_87 = arith.constant 0 : index
    %c0_88 = arith.constant 0 : index
    %188 = vector.load %arg7[%c1, %c0_87, %c0_88] : memref<2x32x96xf32, #tpu.memory_space<vmem>>, vector<1x32x96xf32>
    %189 = vector.shape_cast %188 : vector<1x32x96xf32> to vector<32x96xf32>
    %cst_89 = arith.constant dense<0.000000e+00> : vector<16x96xf32>
    %190 = tpu.matmul %187, %189, %cst_89 {dimension_numbers = #tpu.dot_dimension_numbers<[1], [0], [0], [1], [0, 0, 1, 1], [], []>} : vector<16x32xf32>, vector<32x96xf32>, vector<16x96xf32> -> vector<16x96xf32>
    %c1_90 = arith.constant 1 : index
    %c0_91 = arith.constant 0 : index
    %c0_92 = arith.constant 0 : index
    %191 = vector.load %arg8[%c1_90, %c0_91, %c0_92] : memref<2x1x96xf32, #tpu.memory_space<vmem>>, vector<1x1x96xf32>
    %192 = vector.shape_cast %191 : vector<1x1x96xf32> to vector<1x96xf32>
    %193 = vector.broadcast %192 : vector<1x96xf32> to vector<16x96xf32>
    %194 = arith.addf %190, %193 : vector<16x96xf32>
    %195 = vector.extract_strided_slice %194 {offsets = [0, 0], sizes = [1, 96], strides = [1, 1]} : vector<16x96xf32> to vector<1x96xf32>
    %196 = vector.extract_strided_slice %194 {offsets = [8, 0], sizes = [1, 96], strides = [1, 1]} : vector<16x96xf32> to vector<1x96xf32>
    %197 = tpu.concatenate %195, %196 in 0 : vector<1x96xf32>, vector<1x96xf32> -> vector<2x96xf32>
    %198 = vector.extract_strided_slice %187 {offsets = [0, 0], sizes = [1, 32], strides = [1, 1]} : vector<16x32xf32> to vector<1x32xf32>
    %199 = vector.extract_strided_slice %187 {offsets = [8, 0], sizes = [1, 32], strides = [1, 1]} : vector<16x32xf32> to vector<1x32xf32>
    %200 = tpu.concatenate %198, %199 in 0 : vector<1x32xf32>, vector<1x32xf32> -> vector<2x32xf32>
    %c1_93 = arith.constant 1 : index
    %c0_94 = arith.constant 0 : index
    %c0_95 = arith.constant 0 : index
    %201 = vector.load %arg9[%c1_93, %c0_94, %c0_95] : memref<2x32x32xf32, #tpu.memory_space<vmem>>, vector<1x32x32xf32>
    %202 = vector.shape_cast %201 : vector<1x32x32xf32> to vector<32x32xf32>
    %203 = vector.extract_strided_slice %197 {offsets = [0, 0], sizes = [2, 8], strides = [1, 1]} : vector<2x96xf32> to vector<2x8xf32>
    %204 = vector.extract_strided_slice %194 {offsets = [0, 32], sizes = [16, 8], strides = [1, 1]} : vector<16x96xf32> to vector<16x8xf32>
    %205 = vector.extract_strided_slice %194 {offsets = [0, 64], sizes = [16, 8], strides = [1, 1]} : vector<16x96xf32> to vector<16x8xf32>
    %cst_96 = arith.constant dense<0.000000e+00> : vector<2x16xf32>
    %206 = tpu.matmul %203, %204, %cst_96 {dimension_numbers = #tpu.dot_dimension_numbers<[1], [1], [0], [0], [0, 0, 1, 0], [], []>} : vector<2x8xf32>, vector<16x8xf32>, vector<2x16xf32> -> vector<2x16xf32>
    %cst_97 = arith.constant 0.353553385 : f32
    %207 = vector.broadcast %cst_97 : f32 to vector<2x16xf32>
    %208 = arith.mulf %206, %207 : vector<2x16xf32>
    %209 = arith.addf %208, %11 : vector<2x16xf32>
    %cst_98 = arith.constant dense<0xFF800000> : vector<2xf32>
    %210 = vector.multi_reduction <maximumf>, %209, %cst_98 [1] : vector<2x16xf32> to vector<2xf32>
    %211 = vector.shape_cast %210 : vector<2xf32> to vector<2x1xf32>
    %212 = vector.broadcast %211 : vector<2x1xf32> to vector<2x16xf32>
    %213 = arith.subf %209, %212 : vector<2x16xf32>
    %214 = math.exp %213 : vector<2x16xf32>
    %cst_99 = arith.constant dense<0.000000e+00> : vector<2xf32>
    %215 = vector.multi_reduction <add>, %214, %cst_99 [1] : vector<2x16xf32> to vector<2xf32>
    %216 = vector.shape_cast %215 : vector<2xf32> to vector<2x1xf32>
    %217 = tpu.reciprocal %216 {approx = true} : vector<2x1xf32> -> vector<2x1xf32>
    %218 = vector.broadcast %217 : vector<2x1xf32> to vector<2x16xf32>
    %219 = arith.mulf %214, %218 : vector<2x16xf32>
    %cst_100 = arith.constant dense<0.000000e+00> : vector<2x8xf32>
    %220 = tpu.matmul %219, %205, %cst_100 {dimension_numbers = #tpu.dot_dimension_numbers<[1], [0], [0], [1], [0, 0, 1, 1], [], []>} : vector<2x16xf32>, vector<16x8xf32>, vector<2x8xf32> -> vector<2x8xf32>
    %221 = vector.extract_strided_slice %202 {offsets = [0, 0], sizes = [8, 32], strides = [1, 1]} : vector<32x32xf32> to vector<8x32xf32>
    %cst_101 = arith.constant dense<0.000000e+00> : vector<2x32xf32>
    %222 = tpu.matmul %220, %221, %cst_101 {dimension_numbers = #tpu.dot_dimension_numbers<[1], [0], [0], [1], [0, 0, 1, 1], [], []>} : vector<2x8xf32>, vector<8x32xf32>, vector<2x32xf32> -> vector<2x32xf32>
    %223 = vector.extract_strided_slice %197 {offsets = [0, 8], sizes = [2, 8], strides = [1, 1]} : vector<2x96xf32> to vector<2x8xf32>
    %224 = vector.extract_strided_slice %194 {offsets = [0, 40], sizes = [16, 8], strides = [1, 1]} : vector<16x96xf32> to vector<16x8xf32>
    %225 = vector.extract_strided_slice %194 {offsets = [0, 72], sizes = [16, 8], strides = [1, 1]} : vector<16x96xf32> to vector<16x8xf32>
    %cst_102 = arith.constant dense<0.000000e+00> : vector<2x16xf32>
    %226 = tpu.matmul %223, %224, %cst_102 {dimension_numbers = #tpu.dot_dimension_numbers<[1], [1], [0], [0], [0, 0, 1, 0], [], []>} : vector<2x8xf32>, vector<16x8xf32>, vector<2x16xf32> -> vector<2x16xf32>
    %cst_103 = arith.constant 0.353553385 : f32
    %227 = vector.broadcast %cst_103 : f32 to vector<2x16xf32>
    %228 = arith.mulf %226, %227 : vector<2x16xf32>
    %229 = arith.addf %228, %11 : vector<2x16xf32>
    %cst_104 = arith.constant dense<0xFF800000> : vector<2xf32>
    %230 = vector.multi_reduction <maximumf>, %229, %cst_104 [1] : vector<2x16xf32> to vector<2xf32>
    %231 = vector.shape_cast %230 : vector<2xf32> to vector<2x1xf32>
    %232 = vector.broadcast %231 : vector<2x1xf32> to vector<2x16xf32>
    %233 = arith.subf %229, %232 : vector<2x16xf32>
    %234 = math.exp %233 : vector<2x16xf32>
    %cst_105 = arith.constant dense<0.000000e+00> : vector<2xf32>
    %235 = vector.multi_reduction <add>, %234, %cst_105 [1] : vector<2x16xf32> to vector<2xf32>
    %236 = vector.shape_cast %235 : vector<2xf32> to vector<2x1xf32>
    %237 = tpu.reciprocal %236 {approx = true} : vector<2x1xf32> -> vector<2x1xf32>
    %238 = vector.broadcast %237 : vector<2x1xf32> to vector<2x16xf32>
    %239 = arith.mulf %234, %238 : vector<2x16xf32>
    %cst_106 = arith.constant dense<0.000000e+00> : vector<2x8xf32>
    %240 = tpu.matmul %239, %225, %cst_106 {dimension_numbers = #tpu.dot_dimension_numbers<[1], [0], [0], [1], [0, 0, 1, 1], [], []>} : vector<2x16xf32>, vector<16x8xf32>, vector<2x8xf32> -> vector<2x8xf32>
    %241 = vector.extract_strided_slice %202 {offsets = [8, 0], sizes = [8, 32], strides = [1, 1]} : vector<32x32xf32> to vector<8x32xf32>
    %cst_107 = arith.constant dense<0.000000e+00> : vector<2x32xf32>
    %242 = tpu.matmul %240, %241, %cst_107 {dimension_numbers = #tpu.dot_dimension_numbers<[1], [0], [0], [1], [0, 0, 1, 1], [], []>} : vector<2x8xf32>, vector<8x32xf32>, vector<2x32xf32> -> vector<2x32xf32>
    %243 = arith.addf %222, %242 : vector<2x32xf32>
    %244 = vector.extract_strided_slice %197 {offsets = [0, 16], sizes = [2, 8], strides = [1, 1]} : vector<2x96xf32> to vector<2x8xf32>
    %245 = vector.extract_strided_slice %194 {offsets = [0, 48], sizes = [16, 8], strides = [1, 1]} : vector<16x96xf32> to vector<16x8xf32>
    %246 = vector.extract_strided_slice %194 {offsets = [0, 80], sizes = [16, 8], strides = [1, 1]} : vector<16x96xf32> to vector<16x8xf32>
    %cst_108 = arith.constant dense<0.000000e+00> : vector<2x16xf32>
    %247 = tpu.matmul %244, %245, %cst_108 {dimension_numbers = #tpu.dot_dimension_numbers<[1], [1], [0], [0], [0, 0, 1, 0], [], []>} : vector<2x8xf32>, vector<16x8xf32>, vector<2x16xf32> -> vector<2x16xf32>
    %cst_109 = arith.constant 0.353553385 : f32
    %248 = vector.broadcast %cst_109 : f32 to vector<2x16xf32>
    %249 = arith.mulf %247, %248 : vector<2x16xf32>
    %250 = arith.addf %249, %11 : vector<2x16xf32>
    %cst_110 = arith.constant dense<0xFF800000> : vector<2xf32>
    %251 = vector.multi_reduction <maximumf>, %250, %cst_110 [1] : vector<2x16xf32> to vector<2xf32>
    %252 = vector.shape_cast %251 : vector<2xf32> to vector<2x1xf32>
    %253 = vector.broadcast %252 : vector<2x1xf32> to vector<2x16xf32>
    %254 = arith.subf %250, %253 : vector<2x16xf32>
    %255 = math.exp %254 : vector<2x16xf32>
    %cst_111 = arith.constant dense<0.000000e+00> : vector<2xf32>
    %256 = vector.multi_reduction <add>, %255, %cst_111 [1] : vector<2x16xf32> to vector<2xf32>
    %257 = vector.shape_cast %256 : vector<2xf32> to vector<2x1xf32>
    %258 = tpu.reciprocal %257 {approx = true} : vector<2x1xf32> -> vector<2x1xf32>
    %259 = vector.broadcast %258 : vector<2x1xf32> to vector<2x16xf32>
    %260 = arith.mulf %255, %259 : vector<2x16xf32>
    %cst_112 = arith.constant dense<0.000000e+00> : vector<2x8xf32>
    %261 = tpu.matmul %260, %246, %cst_112 {dimension_numbers = #tpu.dot_dimension_numbers<[1], [0], [0], [1], [0, 0, 1, 1], [], []>} : vector<2x16xf32>, vector<16x8xf32>, vector<2x8xf32> -> vector<2x8xf32>
    %262 = vector.extract_strided_slice %202 {offsets = [16, 0], sizes = [8, 32], strides = [1, 1]} : vector<32x32xf32> to vector<8x32xf32>
    %cst_113 = arith.constant dense<0.000000e+00> : vector<2x32xf32>
    %263 = tpu.matmul %261, %262, %cst_113 {dimension_numbers = #tpu.dot_dimension_numbers<[1], [0], [0], [1], [0, 0, 1, 1], [], []>} : vector<2x8xf32>, vector<8x32xf32>, vector<2x32xf32> -> vector<2x32xf32>
    %264 = arith.addf %243, %263 : vector<2x32xf32>
    %265 = vector.extract_strided_slice %197 {offsets = [0, 24], sizes = [2, 8], strides = [1, 1]} : vector<2x96xf32> to vector<2x8xf32>
    %266 = vector.extract_strided_slice %194 {offsets = [0, 56], sizes = [16, 8], strides = [1, 1]} : vector<16x96xf32> to vector<16x8xf32>
    %267 = vector.extract_strided_slice %194 {offsets = [0, 88], sizes = [16, 8], strides = [1, 1]} : vector<16x96xf32> to vector<16x8xf32>
    %cst_114 = arith.constant dense<0.000000e+00> : vector<2x16xf32>
    %268 = tpu.matmul %265, %266, %cst_114 {dimension_numbers = #tpu.dot_dimension_numbers<[1], [1], [0], [0], [0, 0, 1, 0], [], []>} : vector<2x8xf32>, vector<16x8xf32>, vector<2x16xf32> -> vector<2x16xf32>
    %cst_115 = arith.constant 0.353553385 : f32
    %269 = vector.broadcast %cst_115 : f32 to vector<2x16xf32>
    %270 = arith.mulf %268, %269 : vector<2x16xf32>
    %271 = arith.addf %270, %11 : vector<2x16xf32>
    %cst_116 = arith.constant dense<0xFF800000> : vector<2xf32>
    %272 = vector.multi_reduction <maximumf>, %271, %cst_116 [1] : vector<2x16xf32> to vector<2xf32>
    %273 = vector.shape_cast %272 : vector<2xf32> to vector<2x1xf32>
    %274 = vector.broadcast %273 : vector<2x1xf32> to vector<2x16xf32>
    %275 = arith.subf %271, %274 : vector<2x16xf32>
    %276 = math.exp %275 : vector<2x16xf32>
    %cst_117 = arith.constant dense<0.000000e+00> : vector<2xf32>
    %277 = vector.multi_reduction <add>, %276, %cst_117 [1] : vector<2x16xf32> to vector<2xf32>
    %278 = vector.shape_cast %277 : vector<2xf32> to vector<2x1xf32>
    %279 = tpu.reciprocal %278 {approx = true} : vector<2x1xf32> -> vector<2x1xf32>
    %280 = vector.broadcast %279 : vector<2x1xf32> to vector<2x16xf32>
    %281 = arith.mulf %276, %280 : vector<2x16xf32>
    %cst_118 = arith.constant dense<0.000000e+00> : vector<2x8xf32>
    %282 = tpu.matmul %281, %267, %cst_118 {dimension_numbers = #tpu.dot_dimension_numbers<[1], [0], [0], [1], [0, 0, 1, 1], [], []>} : vector<2x16xf32>, vector<16x8xf32>, vector<2x8xf32> -> vector<2x8xf32>
    %283 = vector.extract_strided_slice %202 {offsets = [24, 0], sizes = [8, 32], strides = [1, 1]} : vector<32x32xf32> to vector<8x32xf32>
    %cst_119 = arith.constant dense<0.000000e+00> : vector<2x32xf32>
    %284 = tpu.matmul %282, %283, %cst_119 {dimension_numbers = #tpu.dot_dimension_numbers<[1], [0], [0], [1], [0, 0, 1, 1], [], []>} : vector<2x8xf32>, vector<8x32xf32>, vector<2x32xf32> -> vector<2x32xf32>
    %285 = arith.addf %264, %284 : vector<2x32xf32>
    %c1_120 = arith.constant 1 : index
    %c0_121 = arith.constant 0 : index
    %c0_122 = arith.constant 0 : index
    %286 = vector.load %arg10[%c1_120, %c0_121, %c0_122] : memref<2x1x32xf32, #tpu.memory_space<vmem>>, vector<1x1x32xf32>
    %287 = vector.shape_cast %286 : vector<1x1x32xf32> to vector<1x32xf32>
    %288 = vector.broadcast %287 : vector<1x32xf32> to vector<2x32xf32>
    %289 = arith.addf %285, %288 : vector<2x32xf32>
    %290 = arith.addf %200, %289 : vector<2x32xf32>
    %c1_123 = arith.constant 1 : index
    %c0_124 = arith.constant 0 : index
    %c0_125 = arith.constant 0 : index
    %291 = vector.load %arg11[%c1_123, %c0_124, %c0_125] : memref<2x1x32xf32, #tpu.memory_space<vmem>>, vector<1x1x32xf32>
    %292 = vector.shape_cast %291 : vector<1x1x32xf32> to vector<1x32xf32>
    %c1_126 = arith.constant 1 : index
    %c0_127 = arith.constant 0 : index
    %c0_128 = arith.constant 0 : index
    %293 = vector.load %arg12[%c1_126, %c0_127, %c0_128] : memref<2x1x32xf32, #tpu.memory_space<vmem>>, vector<1x1x32xf32>
    %294 = vector.shape_cast %293 : vector<1x1x32xf32> to vector<1x32xf32>
    %cst_129 = arith.constant dense<0.000000e+00> : vector<2xf32>
    %295 = vector.multi_reduction <add>, %290, %cst_129 [1] : vector<2x32xf32> to vector<2xf32>
    %296 = vector.shape_cast %295 : vector<2xf32> to vector<2x1xf32>
    %cst_130 = arith.constant 3.200000e+01 : f32
    %297 = vector.broadcast %cst_130 : f32 to vector<2x1xf32>
    %298 = arith.divf %296, %297 : vector<2x1xf32>
    %299 = vector.broadcast %298 : vector<2x1xf32> to vector<2x32xf32>
    %300 = arith.subf %290, %299 : vector<2x32xf32>
    %301 = arith.mulf %300, %300 : vector<2x32xf32>
    %cst_131 = arith.constant dense<0.000000e+00> : vector<2xf32>
    %302 = vector.multi_reduction <add>, %301, %cst_131 [1] : vector<2x32xf32> to vector<2xf32>
    %303 = vector.shape_cast %302 : vector<2xf32> to vector<2x1xf32>
    %cst_132 = arith.constant 3.200000e+01 : f32
    %304 = vector.broadcast %cst_132 : f32 to vector<2x1xf32>
    %305 = arith.divf %303, %304 : vector<2x1xf32>
    %306 = vector.broadcast %298 : vector<2x1xf32> to vector<2x32xf32>
    %307 = arith.subf %290, %306 : vector<2x32xf32>
    %cst_133 = arith.constant 9.99999974E-6 : f32
    %308 = vector.broadcast %cst_133 : f32 to vector<2x1xf32>
    %309 = arith.addf %305, %308 : vector<2x1xf32>
    %310 = math.rsqrt %309 : vector<2x1xf32>
    %311 = vector.broadcast %310 : vector<2x1xf32> to vector<2x32xf32>
    %312 = arith.mulf %307, %311 : vector<2x32xf32>
    %313 = vector.broadcast %292 : vector<1x32xf32> to vector<2x32xf32>
    %314 = arith.mulf %312, %313 : vector<2x32xf32>
    %315 = vector.broadcast %294 : vector<1x32xf32> to vector<2x32xf32>
    %316 = arith.addf %314, %315 : vector<2x32xf32>
    %c1_134 = arith.constant 1 : index
    %c0_135 = arith.constant 0 : index
    %c0_136 = arith.constant 0 : index
    %317 = vector.load %arg13[%c1_134, %c0_135, %c0_136] : memref<2x32x256xf32, #tpu.memory_space<vmem>>, vector<1x32x256xf32>
    %318 = vector.shape_cast %317 : vector<1x32x256xf32> to vector<32x256xf32>
    %cst_137 = arith.constant dense<0.000000e+00> : vector<2x256xf32>
    %319 = tpu.matmul %316, %318, %cst_137 {dimension_numbers = #tpu.dot_dimension_numbers<[1], [0], [0], [1], [0, 0, 1, 1], [], []>} : vector<2x32xf32>, vector<32x256xf32>, vector<2x256xf32> -> vector<2x256xf32>
    %c1_138 = arith.constant 1 : index
    %c0_139 = arith.constant 0 : index
    %c0_140 = arith.constant 0 : index
    %320 = vector.load %arg14[%c1_138, %c0_139, %c0_140] : memref<2x1x256xf32, #tpu.memory_space<vmem>>, vector<1x1x256xf32>
    %321 = vector.shape_cast %320 : vector<1x1x256xf32> to vector<1x256xf32>
    %322 = vector.broadcast %321 : vector<1x256xf32> to vector<2x256xf32>
    %323 = arith.addf %319, %322 : vector<2x256xf32>
    %cst_141 = arith.constant 0.000000e+00 : f32
    %324 = vector.broadcast %cst_141 : f32 to vector<2x256xf32>
    %325 = arith.maximumf %323, %324 : vector<2x256xf32>
    %c1_142 = arith.constant 1 : index
    %c0_143 = arith.constant 0 : index
    %c0_144 = arith.constant 0 : index
    %326 = vector.load %arg15[%c1_142, %c0_143, %c0_144] : memref<2x256x32xf32, #tpu.memory_space<vmem>>, vector<1x256x32xf32>
    %327 = vector.shape_cast %326 : vector<1x256x32xf32> to vector<256x32xf32>
    %cst_145 = arith.constant dense<0.000000e+00> : vector<2x32xf32>
    %328 = tpu.matmul %325, %327, %cst_145 {dimension_numbers = #tpu.dot_dimension_numbers<[1], [0], [0], [1], [0, 0, 1, 1], [], []>} : vector<2x256xf32>, vector<256x32xf32>, vector<2x32xf32> -> vector<2x32xf32>
    %c1_146 = arith.constant 1 : index
    %c0_147 = arith.constant 0 : index
    %c0_148 = arith.constant 0 : index
    %329 = vector.load %arg16[%c1_146, %c0_147, %c0_148] : memref<2x1x32xf32, #tpu.memory_space<vmem>>, vector<1x1x32xf32>
    %330 = vector.shape_cast %329 : vector<1x1x32xf32> to vector<1x32xf32>
    %331 = vector.broadcast %330 : vector<1x32xf32> to vector<2x32xf32>
    %332 = arith.addf %328, %331 : vector<2x32xf32>
    %333 = arith.addf %316, %332 : vector<2x32xf32>
    %c1_149 = arith.constant 1 : index
    %c0_150 = arith.constant 0 : index
    %c0_151 = arith.constant 0 : index
    %334 = vector.load %arg17[%c1_149, %c0_150, %c0_151] : memref<2x1x32xf32, #tpu.memory_space<vmem>>, vector<1x1x32xf32>
    %335 = vector.shape_cast %334 : vector<1x1x32xf32> to vector<1x32xf32>
    %c1_152 = arith.constant 1 : index
    %c0_153 = arith.constant 0 : index
    %c0_154 = arith.constant 0 : index
    %336 = vector.load %arg18[%c1_152, %c0_153, %c0_154] : memref<2x1x32xf32, #tpu.memory_space<vmem>>, vector<1x1x32xf32>
    %337 = vector.shape_cast %336 : vector<1x1x32xf32> to vector<1x32xf32>
    %cst_155 = arith.constant dense<0.000000e+00> : vector<2xf32>
    %338 = vector.multi_reduction <add>, %333, %cst_155 [1] : vector<2x32xf32> to vector<2xf32>
    %339 = vector.shape_cast %338 : vector<2xf32> to vector<2x1xf32>
    %cst_156 = arith.constant 3.200000e+01 : f32
    %340 = vector.broadcast %cst_156 : f32 to vector<2x1xf32>
    %341 = arith.divf %339, %340 : vector<2x1xf32>
    %342 = vector.broadcast %341 : vector<2x1xf32> to vector<2x32xf32>
    %343 = arith.subf %333, %342 : vector<2x32xf32>
    %344 = arith.mulf %343, %343 : vector<2x32xf32>
    %cst_157 = arith.constant dense<0.000000e+00> : vector<2xf32>
    %345 = vector.multi_reduction <add>, %344, %cst_157 [1] : vector<2x32xf32> to vector<2xf32>
    %346 = vector.shape_cast %345 : vector<2xf32> to vector<2x1xf32>
    %cst_158 = arith.constant 3.200000e+01 : f32
    %347 = vector.broadcast %cst_158 : f32 to vector<2x1xf32>
    %348 = arith.divf %346, %347 : vector<2x1xf32>
    %349 = vector.broadcast %341 : vector<2x1xf32> to vector<2x32xf32>
    %350 = arith.subf %333, %349 : vector<2x32xf32>
    %cst_159 = arith.constant 9.99999974E-6 : f32
    %351 = vector.broadcast %cst_159 : f32 to vector<2x1xf32>
    %352 = arith.addf %348, %351 : vector<2x1xf32>
    %353 = math.rsqrt %352 : vector<2x1xf32>
    %354 = vector.broadcast %353 : vector<2x1xf32> to vector<2x32xf32>
    %355 = arith.mulf %350, %354 : vector<2x32xf32>
    %356 = vector.broadcast %335 : vector<1x32xf32> to vector<2x32xf32>
    %357 = arith.mulf %355, %356 : vector<2x32xf32>
    %358 = vector.broadcast %337 : vector<1x32xf32> to vector<2x32xf32>
    %359 = arith.addf %357, %358 : vector<2x32xf32>
    %c0_160 = arith.constant 0 : index
    %c0_161 = arith.constant 0 : index
    %360 = vector.load %arg19[%c0_160, %c0_161] : memref<2x32xf32, #tpu.memory_space<vmem>>, vector<2x32xf32>
    tpu.vector_store %arg19[%c0_160, %c0_161], %359 {strides = array<i32>} : memref<2x32xf32, #tpu.memory_space<vmem>>, vector<2x32xf32>,
    return
  }
  func.func @transform_0(%arg0: i32) -> (i32, i32) {
    %c0_i32 = arith.constant 0 : i32
    %c0_i32_0 = arith.constant 0 : i32
    %c0_i32_1 = arith.constant 0 : i32
    return %c0_i32, %c0_i32_0 : i32, i32
  }
  func.func @transform_1(%arg0: i32) -> (i32, i32) {
    %c0_i32 = arith.constant 0 : i32
    %c0_i32_0 = arith.constant 0 : i32
    %c0_i32_1 = arith.constant 0 : i32
    return %c0_i32, %c0_i32_0 : i32, i32
  }
  func.func @transform_2(%arg0: i32) -> (i32, i32) {
    %c0_i32 = arith.constant 0 : i32
    %c0_i32_0 = arith.constant 0 : i32
    %c0_i32_1 = arith.constant 0 : i32
    return %c0_i32, %c0_i32_0 : i32, i32
  }
  func.func @transform_3(%arg0: i32) -> (i32, i32) {
    %c0_i32 = arith.constant 0 : i32
    %c0_i32_0 = arith.constant 0 : i32
    %c0_i32_1 = arith.constant 0 : i32
    return %c0_i32, %c0_i32_0 : i32, i32
  }
  func.func @transform_4(%arg0: i32) -> (i32, i32) {
    %c0_i32 = arith.constant 0 : i32
    %c0_i32_0 = arith.constant 0 : i32
    %c0_i32_1 = arith.constant 0 : i32
    return %c0_i32, %c0_i32_0 : i32, i32
  }
  func.func @transform_5(%arg0: i32) -> (i32, i32) {
    %c0_i32 = arith.constant 0 : i32
    %c0_i32_0 = arith.constant 0 : i32
    %c0_i32_1 = arith.constant 0 : i32
    return %c0_i32, %c0_i32_0 : i32, i32
  }
  func.func @transform_6(%arg0: i32) -> (i32, i32, i32) {
    %c0_i32 = arith.constant 0 : i32
    %c0_i32_0 = arith.constant 0 : i32
    %c0_i32_1 = arith.constant 0 : i32
    %c0_i32_2 = arith.constant 0 : i32
    return %c0_i32, %c0_i32_0, %c0_i32_1 : i32, i32, i32
  }
  func.func @transform_7(%arg0: i32) -> (i32, i32, i32) {
    %c0_i32 = arith.constant 0 : i32
    %c0_i32_0 = arith.constant 0 : i32
    %c0_i32_1 = arith.constant 0 : i32
    %c0_i32_2 = arith.constant 0 : i32
    return %c0_i32, %c0_i32_0, %c0_i32_1 : i32, i32, i32
  }
  func.func @transform_8(%arg0: i32) -> (i32, i32, i32) {
    %c0_i32 = arith.constant 0 : i32
    %c0_i32_0 = arith.constant 0 : i32
    %c0_i32_1 = arith.constant 0 : i32
    %c0_i32_2 = arith.constant 0 : i32
    return %c0_i32, %c0_i32_0, %c0_i32_1 : i32, i32, i32
  }
  func.func @transform_9(%arg0: i32) -> (i32, i32, i32) {
    %c0_i32 = arith.constant 0 : i32
    %c0_i32_0 = arith.constant 0 : i32
    %c0_i32_1 = arith.constant 0 : i32
    %c0_i32_2 = arith.constant 0 : i32
    return %c0_i32, %c0_i32_0, %c0_i32_1 : i32, i32, i32
  }
  func.func @transform_10(%arg0: i32) -> (i32, i32, i32) {
    %c0_i32 = arith.constant 0 : i32
    %c0_i32_0 = arith.constant 0 : i32
    %c0_i32_1 = arith.constant 0 : i32
    %c0_i32_2 = arith.constant 0 : i32
    return %c0_i32, %c0_i32_0, %c0_i32_1 : i32, i32, i32
  }
  func.func @transform_11(%arg0: i32) -> (i32, i32, i32) {
    %c0_i32 = arith.constant 0 : i32
    %c0_i32_0 = arith.constant 0 : i32
    %c0_i32_1 = arith.constant 0 : i32
    %c0_i32_2 = arith.constant 0 : i32
    return %c0_i32, %c0_i32_0, %c0_i32_1 : i32, i32, i32
  }
  func.func @transform_12(%arg0: i32) -> (i32, i32, i32) {
    %c0_i32 = arith.constant 0 : i32
    %c0_i32_0 = arith.constant 0 : i32
    %c0_i32_1 = arith.constant 0 : i32
    %c0_i32_2 = arith.constant 0 : i32
    return %c0_i32, %c0_i32_0, %c0_i32_1 : i32, i32, i32
  }
  func.func @transform_13(%arg0: i32) -> (i32, i32, i32) {
    %c0_i32 = arith.constant 0 : i32
    %c0_i32_0 = arith.constant 0 : i32
    %c0_i32_1 = arith.constant 0 : i32
    %c0_i32_2 = arith.constant 0 : i32
    return %c0_i32, %c0_i32_0, %c0_i32_1 : i32, i32, i32
  }
  func.func @transform_14(%arg0: i32) -> (i32, i32, i32) {
    %c0_i32 = arith.constant 0 : i32
    %c0_i32_0 = arith.constant 0 : i32
    %c0_i32_1 = arith.constant 0 : i32
    %c0_i32_2 = arith.constant 0 : i32
    return %c0_i32, %c0_i32_0, %c0_i32_1 : i32, i32, i32
  }
  func.func @transform_15(%arg0: i32) -> (i32, i32, i32) {
    %c0_i32 = arith.constant 0 : i32
    %c0_i32_0 = arith.constant 0 : i32
    %c0_i32_1 = arith.constant 0 : i32
    %c0_i32_2 = arith.constant 0 : i32
    return %c0_i32, %c0_i32_0, %c0_i32_1 : i32, i32, i32
  }
  func.func @transform_16(%arg0: i32) -> (i32, i32, i32) {
    %c0_i32 = arith.constant 0 : i32
    %c0_i32_0 = arith.constant 0 : i32
    %c0_i32_1 = arith.constant 0 : i32
    %c0_i32_2 = arith.constant 0 : i32
    return %c0_i32, %c0_i32_0, %c0_i32_1 : i32, i32, i32
  }
  func.func @transform_17(%arg0: i32) -> (i32, i32, i32) {
    %c0_i32 = arith.constant 0 : i32
    %c0_i32_0 = arith.constant 0 : i32
    %c0_i32_1 = arith.constant 0 : i32
    %c0_i32_2 = arith.constant 0 : i32
    return %c0_i32, %c0_i32_0, %c0_i32_1 : i32, i32, i32
  }
  func.func @transform_18(%arg0: i32) -> (i32, i32) {
    %c0_i32 = arith.constant 0 : i32
    %c0_i32_0 = arith.constant 0 : i32
    %c0_i32_1 = arith.constant 0 : i32
    return %c0_i32, %c0_i32_0 : i32, i32
  }
}

</mosaic_0001>

<llo_original>
// kernel: transformer_forward.1
$region0: #{transformer_forward.1}
  #allocation0 [shape = 'u32[]', space=smem, size = 0x4, offset = 0x4, fixed_abs, tag = 'smem constant byte address 0x4 - core index']
  #allocation1 [shape = 'u32[72,128]{1,0:T(1,128)}', space=vmem, size = 0x9000, scoped, tag = 'internal scratch']
  %s0 = inlined_call_operand.vmem [shape: s32[1,16], index: 0, kind: input, shape index: {}]
  %s1 = inlined_call_operand.vmem [shape: s32[16,1], index: 1, kind: input, shape index: {}]
  %s2 = inlined_call_operand.vmem [shape: f32[18,32], index: 2, kind: input, shape index: {}]
  %s3 = inlined_call_operand.vmem [shape: f32[16,32], index: 3, kind: input, shape index: {}]
  %s4 = inlined_call_operand.vmem [shape: f32[16,16], index: 4, kind: input, shape index: {}]
  %s5 = inlined_call_operand.vmem [shape: f32[2,16], index: 5, kind: input, shape index: {}]
  %s6 = inlined_call_operand.vmem [shape: f32[2,32,96], index: 6, kind: input, shape index: {}]
  %s7 = inlined_call_operand.vmem [shape: f32[2,1,96], index: 7, kind: input, shape index: {}]
  %s8 = inlined_call_operand.vmem [shape: f32[2,32,32], index: 8, kind: input, shape index: {}]
  %s9 = inlined_call_operand.vmem [shape: f32[2,1,32], index: 9, kind: input, shape index: {}]
  %s10 = inlined_call_operand.vmem [shape: f32[2,1,32], index: 10, kind: input, shape index: {}]
  %s11 = inlined_call_operand.vmem [shape: f32[2,1,32], index: 11, kind: input, shape index: {}]
  %s12 = inlined_call_operand.vmem [shape: f32[2,32,256], index: 12, kind: input, shape index: {}]
  %s13 = inlined_call_operand.vmem [shape: f32[2,1,256], index: 13, kind: input, shape index: {}]
  %s14 = inlined_call_operand.vmem [shape: f32[2,256,32], index: 14, kind: input, shape index: {}]
  %s15 = inlined_call_operand.vmem [shape: f32[2,1,32], index: 15, kind: input, shape index: {}]
  %s16 = inlined_call_operand.vmem [shape: f32[2,1,32], index: 16, kind: input, shape index: {}]
  %s17 = inlined_call_operand.vmem [shape: f32[2,1,32], index: 17, kind: input, shape index: {}]
  %s18 = inlined_call_operand.hbm [shape: f32[2,32], index: 18, kind: output, shape index: {}]
  %s19 = sld [smem:[#allocation0]]
  $region82: #{transformer_forward.1} parent=0
    _
  %s21 = ssub.s32 1, %s19
  %s22 = scalar_select 0, %s21, %s19
  $region1: #{transformer_forward.1} parent=0
    #allocation2 [shape = 'u8[1024]{0}', space=vmem, size = 0x400, scoped, tag = 'output window, operand 0, single buffered']
    #allocation3 [shape = 's32[1]{0}', space=sflag, size = 0x4, scoped, tag = 'scoped memory for transformer_forward.1']
    %23 = vsyncpa [#allocation3], 0
    // Predicated region
    $region2: #{transformer_forward.1} parent=1 // pred_check
      _
    $region3: #{transformer_forward.1} parent=1 // pred_check_branch
      %25 = sbr.rel (0) target = $region5
    $region4: #{transformer_forward.1} parent=1 // pred_region
      _
    $region5: #{transformer_forward.1} parent=1 // pred_fallthru
      _
    // Predicated region
    $region6: #{transformer_forward.1} parent=1 // pred_check
      _
    $region7: #{transformer_forward.1} parent=1 // pred_check_branch
      %27 = sbr.rel (0) target = $region9
    $region8: #{transformer_forward.1} parent=1 // pred_region
      _
    $region9: #{transformer_forward.1} parent=1 // pred_fallthru
      _
    // Predicated region
    $region10: #{transformer_forward.1} parent=1 // pred_check
      _
    $region11: #{transformer_forward.1} parent=1 // pred_check_branch
      %29 = sbr.rel (0) target = $region13
    $region12: #{transformer_forward.1} parent=1 // pred_region
      _
    $region13: #{transformer_forward.1} parent=1 // pred_fallthru
      _
    // Predicated region
    $region14: #{transformer_forward.1} parent=1 // pred_check
      _
    $region15: #{transformer_forward.1} parent=1 // pred_check_branch
      %31 = sbr.rel (0) target = $region17
    $region16: #{transformer_forward.1} parent=1 // pred_region
      _
    $region17: #{transformer_forward.1} parent=1 // pred_fallthru
      _
    // Predicated region
    $region18: #{transformer_forward.1} parent=1 // pred_check
      _
    $region19: #{transformer_forward.1} parent=1 // pred_check_branch
      %33 = sbr.rel (0) target = $region21
    $region20: #{transformer_forward.1} parent=1 // pred_region
      _
    $region21: #{transformer_forward.1} parent=1 // pred_fallthru
      _
    // Predicated region
    $region22: #{transformer_forward.1} parent=1 // pred_check
      _
    $region23: #{transformer_forward.1} parent=1 // pred_check_branch
      %35 = sbr.rel (0) target = $region25
    $region24: #{transformer_forward.1} parent=1 // pred_region
      _
    $region25: #{transformer_forward.1} parent=1 // pred_fallthru
      _
    // Predicated region
    $region26: #{transformer_forward.1} parent=1 // pred_check
      _
    $region27: #{transformer_forward.1} parent=1 // pred_check_branch
      %37 = sbr.rel (0) target = $region29
    $region28: #{transformer_forward.1} parent=1 // pred_region
      _
    $region29: #{transformer_forward.1} parent=1 // pred_fallthru
      _
    // Predicated region
    $region30: #{transformer_forward.1} parent=1 // pred_check
      _
    $region31: #{transformer_forward.1} parent=1 // pred_check_branch
      %39 = sbr.rel (0) target = $region33
    $region32: #{transformer_forward.1} parent=1 // pred_region
      _
    $region33: #{transformer_forward.1} parent=1 // pred_fallthru
      _
    // Predicated region
    $region34: #{transformer_forward.1} parent=1 // pred_check
      _
    $region35: #{transformer_forward.1} parent=1 // pred_check_branch
      %41 = sbr.rel (0) target = $region37
    $region36: #{transformer_forward.1} parent=1 // pred_region
      _
    $region37: #{transformer_forward.1} parent=1 // pred_fallthru
      _
    // Predicated region
    $region38: #{transformer_forward.1} parent=1 // pred_check
      _
    $region39: #{transformer_forward.1} parent=1 // pred_check_branch
      %43 = sbr.rel (0) target = $region41
    $region40: #{transformer_forward.1} parent=1 // pred_region
      _
    $region41: #{transformer_forward.1} parent=1 // pred_fallthru
      _
    // Predicated region
    $region42: #{transformer_forward.1} parent=1 // pred_check
      _
    $region43: #{transformer_forward.1} parent=1 // pred_check_branch
      %45 = sbr.rel (0) target = $region45
    $region44: #{transformer_forward.1} parent=1 // pred_region
      _
    $region45: #{transformer_forward.1} parent=1 // pred_fallthru
      _
    // Predicated region
    $region46: #{transformer_forward.1} parent=1 // pred_check
      _
    $region47: #{transformer_forward.1} parent=1 // pred_check_branch
      %47 = sbr.rel (0) target = $region49
    $region48: #{transformer_forward.1} parent=1 // pred_region
      _
    $region49: #{transformer_forward.1} parent=1 // pred_fallthru
      _
    // Predicated region
    $region50: #{transformer_forward.1} parent=1 // pred_check
      _
    $region51: #{transformer_forward.1} parent=1 // pred_check_branch
      %49 = sbr.rel (0) target = $region53
    $region52: #{transformer_forward.1} parent=1 // pred_region
      _
    $region53: #{transformer_forward.1} parent=1 // pred_fallthru
      _
    // Predicated region
    $region54: #{transformer_forward.1} parent=1 // pred_check
      _
    $region55: #{transformer_forward.1} parent=1 // pred_check_branch
      %51 = sbr.rel (0) target = $region57
    $region56: #{transformer_forward.1} parent=1 // pred_region
      _
    $region57: #{transformer_forward.1} parent=1 // pred_fallthru
      _
    // Predicated region
    $region58: #{transformer_forward.1} parent=1 // pred_check
      _
    $region59: #{transformer_forward.1} parent=1 // pred_check_branch
      %53 = sbr.rel (0) target = $region61
    $region60: #{transformer_forward.1} parent=1 // pred_region
      _
    $region61: #{transformer_forward.1} parent=1 // pred_fallthru
      _
    // Predicated region
    $region62: #{transformer_forward.1} parent=1 // pred_check
      _
    $region63: #{transformer_forward.1} parent=1 // pred_check_branch
      %55 = sbr.rel (0) target = $region65
    $region64: #{transformer_forward.1} parent=1 // pred_region
      _
    $region65: #{transformer_forward.1} parent=1 // pred_fallthru
      _
    // Predicated region
    $region66: #{transformer_forward.1} parent=1 // pred_check
      _
    $region67: #{transformer_forward.1} parent=1 // pred_check_branch
      %57 = sbr.rel (0) target = $region69
    $region68: #{transformer_forward.1} parent=1 // pred_region
      _
    $region69: #{transformer_forward.1} parent=1 // pred_fallthru
      _
    // Predicated region
    $region70: #{transformer_forward.1} parent=1 // pred_check
      _
    $region71: #{transformer_forward.1} parent=1 // pred_check_branch
      %59 = sbr.rel (0) target = $region73
    $region72: #{transformer_forward.1} parent=1 // pred_region
      _
    $region73: #{transformer_forward.1} parent=1 // pred_fallthru
      _
    %v60 = vld [vmem:[%s0] sm:$0x1]
    %vm61 = vcmp.ge.s32.totalorder %v60, 16
    %v62 = vsel %vm61, -1e+09, 0.0
    %v63 = vld [vmem:[%s4] sm:$0xff]
    %v64 = vld [vmem:[%s4 + $0x8] sm:$0xff]
    %v66 = vperm.slane %v62, 0
    %v68 = vadd.f32 %v63, %v66
    %v69 = vadd.f32 %v64, %v66
    %v70 = vld [vmem:[%s5] sm:$0x3]
    %v71 = vadd.f32 %v70, %v66
    %v72 = vlaneseq
    %v73 = vand.u32 %v72, 127
    %v74 = vld [vmem:[%s1] sm:$0xff]
    %v75 = vld [vmem:[%s1 + $0x8] sm:$0xff]
    %76 = vset.pattern.permute.xlu0 0
    %77 = vperm.xlu0 %76, %v74
    %v78 = vpop.permute.xlu0 %77
    %79 = vset.pattern.permute.xlu0 0
    %80 = vperm.xlu0 %79, %v75
    %v81 = vpop.permute.xlu0 %80
    %vm82 = vcmp.eq.s32.totalorder %v73, %v78
    %vm83 = vcmp.eq.s32.totalorder %v73, %v81
    %v84 = vsel %vm82, 1, 0
    %v85 = vsel %vm83, 1, 0
    %v86 = vcvt.s32.f32 %v84
    %v87 = vcvt.s32.f32 %v85
    %v88 = vld [vmem:[%s2] sm:$0xff]
    %v89 = vld [vmem:[%s2 + $0x8] sm:$0xff]
    %v90 = vld [vmem:[%s2 + $0x10] sm:$0x3]
    %v91 = vld [vmem:[%s3] sm:$0xff]
    %v92 = vld [vmem:[%s3 + $0x8] sm:$0xff]
    %vm93 = vcmask 146432
    %v95 = vsel %vm93, %v86, 0
    %v98 = vsel %vm93, %v87, 0
    %vm100 = vcmask 1041408
    %v102 = vsel %vm100, %v90, 0
    %104 = vmatpush.msra.mxu0 0.0
    %105 = vmatpush.msra.mxu0 0.0
    %106 = vmatpush.msra.mxu0 0.0
    %107 = vmatpush.msra.mxu0 0.0
    %108 = vmatpush.msra.mxu0 0.0
    %109 = vmatpush.msra.mxu0 0.0
    %110 = vmatpush.msra.mxu0 0.0
    %111 = vmatpush.msra.mxu0 0.0
    %112 = vmatpush.msra.mxu0 0.0
    %113 = vmatpush.msra.mxu0 0.0
    %114 = vmatpush.msra.mxu0 0.0
    %115 = vmatpush.msra.mxu0 0.0
    %116 = vmatpush.msra.mxu0 0.0
    %117 = vmatpush.msra.mxu0 %v102
    %118 = vmatpush.msra.mxu0 %v89
    %119 = vmatpush.msra.mxu0 %v88
    %120 = vmatmul.f32.gmra.mxu0 %v95
    %v121 = vpop.f32.mrf.mxu0
    %v122 = vadd.f32 %v91, %v121
    %123 = vmatmul.f32.gmra.mxu0 %v98
    %v124 = vpop.f32.mrf.mxu0
    %v125 = vadd.f32 %v92, %v124
    %126 = vdwg.mxu0
    %v127 = vld [vmem:[%s6] sm:$0xff]
    %v128 = vld [vmem:[%s6 + $0x8] sm:$0xff]
    %v129 = vld [vmem:[%s6 + $0x10] sm:$0xff]
    %v130 = vld [vmem:[%s6 + $0x18] sm:$0xff]
    %v131 = vld [vmem:[%s7] sm:$0x1]
    %v133 = vperm.slane %v131, 0
    %vm135 = vcmask 261120
    %v137 = vsel %vm135, %v122, 0
    %v140 = vsel %vm135, %v125, 0
    %142 = vmatpush.msra.mxu0 0.0
    %143 = vmatpush.msra.mxu0 0.0
    %144 = vmatpush.msra.mxu0 0.0
    %145 = vmatpush.msra.mxu0 0.0
    %146 = vmatpush.msra.mxu0 0.0
    %147 = vmatpush.msra.mxu0 0.0
    %148 = vmatpush.msra.mxu0 0.0
    %149 = vmatpush.msra.mxu0 0.0
    %150 = vmatpush.msra.mxu0 0.0
    %151 = vmatpush.msra.mxu0 0.0
    %152 = vmatpush.msra.mxu0 0.0
    %153 = vmatpush.msra.mxu0 0.0
    %154 = vmatpush.msra.mxu0 %v130
    %155 = vmatpush.msra.mxu0 %v129
    %156 = vmatpush.msra.mxu0 %v128
    %157 = vmatpush.msra.mxu0 %v127
    %158 = vmatmul.f32.gmra.mxu0 %v137
    %v159 = vpop.f32.mrf.mxu0
    %v160 = vadd.f32 %v133, %v159
    %161 = vmatmul.f32.gmra.mxu0 %v140
    %v162 = vpop.f32.mrf.mxu0
    %v163 = vadd.f32 %v133, %v162
    %164 = vdwg.mxu0
    %v165 = vld [vmem:[%s8] sm:$0xff]
    %v166 = vld [vmem:[%s8 + $0x8] sm:$0xff]
    %v167 = vld [vmem:[%s8 + $0x10] sm:$0xff]
    %v168 = vld [vmem:[%s8 + $0x18] sm:$0xff]
    %171 = vrot.lane.b32.xlu0 %v160, 96
    %v172 = vpop.permute.xlu0 %171
    %173 = vrot.lane.b32.xlu0 %v163, 96
    %v174 = vpop.permute.xlu0 %173
    %vm175 = vcmask 64512
    %v176 = vsel %vm175, %v160, 0
    %v178 = vsel %vm175, %v163, 0
    %v180 = vsel %vm175, %v172, 0
    %v182 = vsel %vm175, %v174, 0
    %184 = vmatpush.xpose.msra.mxu0 0.0
    %185 = vmatpush.xpose.msra.mxu0 0.0
    %186 = vmatpush.xpose.msra.mxu0 0.0
    %187 = vmatpush.xpose.msra.mxu0 0.0
    %188 = vmatpush.xpose.msra.mxu0 0.0
    %189 = vmatpush.xpose.msra.mxu0 0.0
    %190 = vmatpush.xpose.msra.mxu0 0.0
    %191 = vmatpush.xpose.msra.mxu0 0.0
    %192 = vmatpush.xpose.msra.mxu0 0.0
    %193 = vmatpush.xpose.msra.mxu0 0.0
    %194 = vmatpush.xpose.msra.mxu0 0.0
    %195 = vmatpush.xpose.msra.mxu0 0.0
    %196 = vmatpush.xpose.msra.mxu0 0.0
    %197 = vmatpush.xpose.msra.mxu0 0.0
    %198 = vmatpush.xpose.msra.mxu0 %v182
    %199 = vmatpush.xpose.msra.mxu0 %v180
    %200 = vmatmul.f32.gmra.mxu0 %v176
    %v201 = vpop.f32.mrf.mxu0
    %v202 = vadd.f32 0.0, %v201
    %203 = vmatmul.f32.gmra.mxu0 %v178
    %v204 = vpop.f32.mrf.mxu0
    %v205 = vadd.f32 0.0, %v204
    %206 = vdwg.mxu0
    %v207 = vmul.f32 %v202, 0.35355338
    %v208 = vmul.f32 %v205, 0.35355338
    %v209 = vadd.f32 %v207, %v68
    %v210 = vadd.f32 %v208, %v69
    %vm211 = vcmask 130048
    %v212 = vsel %vm211, %v209, -inf
    %213 = vmax.xlane.f32.xlu0 %v212
    %v214 = vpop.xlane.xlu0 %213
    %v215 = vsel %vm211, %v210, -inf
    %216 = vmax.xlane.f32.xlu0 %v215
    %v217 = vpop.xlane.xlu0 %216
    %v218 = vsub.f32 %v209, %v214
    %v219 = vsub.f32 %v210, %v217
    %v220 = vmul.f32 %v218, 1.442695
    %v221 = vpow.pop %v220
    %v222 = vmul.f32 %v219, 1.442695
    %v223 = vpow.pop %v222
    %v224 = vsel %vm211, %v221, 0.0
    %225 = vadd.xlane.f32.xlu0 %v224
    %v226 = vpop.xlane.xlu0 %225
    %v227 = vsel %vm211, %v223, 0.0
    %228 = vadd.xlane.f32.xlu0 %v227
    %v229 = vpop.xlane.xlu0 %228
    %v230 = vrcp.pop %v226
    %v231 = vrcp.pop %v229
    %v232 = vmul.f32 %v221, %v230
    %v233 = vmul.f32 %v223, %v231
    %234 = vrot.lane.b32.xlu0 %v160, 64
    %v235 = vpop.permute.xlu0 %234
    %236 = vrot.lane.b32.xlu0 %v163, 64
    %v237 = vpop.permute.xlu0 %236
    %v241 = vsel %vm211, %v232, 0
    %v244 = vsel %vm211, %v233, 0
    %246 = vmatpush.msra.mxu0 0.0
    %247 = vmatpush.msra.mxu0 0.0
    %248 = vmatpush.msra.mxu0 0.0
    %249 = vmatpush.msra.mxu0 0.0
    %250 = vmatpush.msra.mxu0 0.0
    %251 = vmatpush.msra.mxu0 0.0
    %252 = vmatpush.msra.mxu0 0.0
    %253 = vmatpush.msra.mxu0 0.0
    %254 = vmatpush.msra.mxu0 0.0
    %255 = vmatpush.msra.mxu0 0.0
    %256 = vmatpush.msra.mxu0 0.0
    %257 = vmatpush.msra.mxu0 0.0
    %258 = vmatpush.msra.mxu0 0.0
    %259 = vmatpush.msra.mxu0 0.0
    %260 = vmatpush.msra.mxu0 %v237
    %261 = vmatpush.msra.mxu0 %v235
    %262 = vmatmul.f32.gmra.mxu0 %v241
    %v263 = vpop.f32.mrf.mxu0
    %v264 = vadd.f32 0.0, %v263
    %265 = vmatmul.f32.gmra.mxu0 %v244
    %v266 = vpop.f32.mrf.mxu0
    %v267 = vadd.f32 0.0, %v266
    %268 = vdwg.mxu0
    %269 = vrot.lane.b32.xlu0 %v160, 120
    %v270 = vpop.permute.xlu0 %269
    %271 = vrot.lane.b32.xlu0 %v163, 120
    %v272 = vpop.permute.xlu0 %271
    %273 = vrot.lane.b32.xlu0 %v160, 88
    %v274 = vpop.permute.xlu0 %273
    %275 = vrot.lane.b32.xlu0 %v163, 88
    %v276 = vpop.permute.xlu0 %275
    %v277 = vsel %vm175, %v270, 0
    %v279 = vsel %vm175, %v272, 0
    %v281 = vsel %vm175, %v274, 0
    %v283 = vsel %vm175, %v276, 0
    %285 = vmatpush.xpose.msra.mxu0 0.0
    %286 = vmatpush.xpose.msra.mxu0 0.0
    %287 = vmatpush.xpose.msra.mxu0 0.0
    %288 = vmatpush.xpose.msra.mxu0 0.0
    %289 = vmatpush.xpose.msra.mxu0 0.0
    %290 = vmatpush.xpose.msra.mxu0 0.0
    %291 = vmatpush.xpose.msra.mxu0 0.0
    %292 = vmatpush.xpose.msra.mxu0 0.0
    %293 = vmatpush.xpose.msra.mxu0 0.0
    %294 = vmatpush.xpose.msra.mxu0 0.0
    %295 = vmatpush.xpose.msra.mxu0 0.0
    %296 = vmatpush.xpose.msra.mxu0 0.0
    %297 = vmatpush.xpose.msra.mxu0 0.0
    %298 = vmatpush.xpose.msra.mxu0 0.0
    %299 = vmatpush.xpose.msra.mxu0 %v283
    %300 = vmatpush.xpose.msra.mxu0 %v281
    %301 = vmatmul.f32.gmra.mxu0 %v277
    %v302 = vpop.f32.mrf.mxu0
    %v303 = vadd.f32 0.0, %v302
    %304 = vmatmul.f32.gmra.mxu0 %v279
    %v305 = vpop.f32.mrf.mxu0
    %v306 = vadd.f32 0.0, %v305
    %307 = vdwg.mxu0
    %v308 = vmul.f32 %v303, 0.35355338
    %v309 = vmul.f32 %v306, 0.35355338
    %v310 = vadd.f32 %v308, %v68
    %v311 = vadd.f32 %v309, %v69
    %v312 = vsel %vm211, %v310, -inf
    %313 = vmax.xlane.f32.xlu0 %v312
    %v314 = vpop.xlane.xlu0 %313
    %v315 = vsel %vm211, %v311, -inf
    %316 = vmax.xlane.f32.xlu0 %v315
    %v317 = vpop.xlane.xlu0 %316
    %v318 = vsub.f32 %v310, %v314
    %v319 = vsub.f32 %v311, %v317
    %v320 = vmul.f32 %v318, 1.442695
    %v321 = vpow.pop %v320
    %v322 = vmul.f32 %v319, 1.442695
    %v323 = vpow.pop %v322
    %v324 = vsel %vm211, %v321, 0.0
    %325 = vadd.xlane.f32.xlu0 %v324
    %v326 = vpop.xlane.xlu0 %325
    %v327 = vsel %vm211, %v323, 0.0
    %328 = vadd.xlane.f32.xlu0 %v327
    %v329 = vpop.xlane.xlu0 %328
    %v330 = vrcp.pop %v326
    %v331 = vrcp.pop %v329
    %v332 = vmul.f32 %v321, %v330
    %v333 = vmul.f32 %v323, %v331
    %334 = vrot.lane.b32.xlu0 %v160, 56
    %v335 = vpop.permute.xlu0 %334
    %336 = vrot.lane.b32.xlu0 %v163, 56
    %v337 = vpop.permute.xlu0 %336
    %v341 = vsel %vm211, %v332, 0
    %v344 = vsel %vm211, %v333, 0
    %346 = vmatpush.msra.mxu0 0.0
    %347 = vmatpush.msra.mxu0 0.0
    %348 = vmatpush.msra.mxu0 0.0
    %349 = vmatpush.msra.mxu0 0.0
    %350 = vmatpush.msra.mxu0 0.0
    %351 = vmatpush.msra.mxu0 0.0
    %352 = vmatpush.msra.mxu0 0.0
    %353 = vmatpush.msra.mxu0 0.0
    %354 = vmatpush.msra.mxu0 0.0
    %355 = vmatpush.msra.mxu0 0.0
    %356 = vmatpush.msra.mxu0 0.0
    %357 = vmatpush.msra.mxu0 0.0
    %358 = vmatpush.msra.mxu0 0.0
    %359 = vmatpush.msra.mxu0 0.0
    %360 = vmatpush.msra.mxu0 %v337
    %361 = vmatpush.msra.mxu0 %v335
    %362 = vmatmul.f32.gmra.mxu0 %v341
    %v363 = vpop.f32.mrf.mxu0
    %v364 = vadd.f32 0.0, %v363
    %365 = vmatmul.f32.gmra.mxu0 %v344
    %v366 = vpop.f32.mrf.mxu0
    %v367 = vadd.f32 0.0, %v366
    %368 = vdwg.mxu0
    %v370 = vsel %vm175, %v364, 0
    %v373 = vsel %vm175, %v367, 0
    %375 = vmatpush.msra.mxu0 0.0
    %376 = vmatpush.msra.mxu0 0.0
    %377 = vmatpush.msra.mxu0 0.0
    %378 = vmatpush.msra.mxu0 0.0
    %379 = vmatpush.msra.mxu0 0.0
    %380 = vmatpush.msra.mxu0 0.0
    %381 = vmatpush.msra.mxu0 0.0
    %382 = vmatpush.msra.mxu0 0.0
    %383 = vmatpush.msra.mxu0 0.0
    %384 = vmatpush.msra.mxu0 0.0
    %385 = vmatpush.msra.mxu0 0.0
    %386 = vmatpush.msra.mxu0 0.0
    %387 = vmatpush.msra.mxu0 0.0
    %388 = vmatpush.msra.mxu0 0.0
    %389 = vmatpush.msra.mxu0 0.0
    %390 = vmatpush.msra.mxu0 %v166
    %391 = vmatmul.f32.gmra.mxu0 %v370
    %v392 = vpop.f32.mrf.mxu0
    %v393 = vadd.f32 0.0, %v392
    %394 = vmatmul.f32.gmra.mxu0 %v373
    %v395 = vpop.f32.mrf.mxu0
    %v396 = vadd.f32 0.0, %v395
    %397 = vdwg.mxu0
    %v399 = vsel %vm175, %v264, 0
    %v402 = vsel %vm175, %v267, 0
    %404 = vmatpush.msra.mxu0 0.0
    %405 = vmatpush.msra.mxu0 0.0
    %406 = vmatpush.msra.mxu0 0.0
    %407 = vmatpush.msra.mxu0 0.0
    %408 = vmatpush.msra.mxu0 0.0
    %409 = vmatpush.msra.mxu0 0.0
    %410 = vmatpush.msra.mxu0 0.0
    %411 = vmatpush.msra.mxu0 0.0
    %412 = vmatpush.msra.mxu0 0.0
    %413 = vmatpush.msra.mxu0 0.0
    %414 = vmatpush.msra.mxu0 0.0
    %415 = vmatpush.msra.mxu0 0.0
    %416 = vmatpush.msra.mxu0 0.0
    %417 = vmatpush.msra.mxu0 0.0
    %418 = vmatpush.msra.mxu0 0.0
    %419 = vmatpush.msra.mxu0 %v165
    %420 = vmatmul.f32.gmra.mxu0 %v399
    %v421 = vpop.f32.mrf.mxu0
    %v422 = vadd.f32 %v393, %v421
    %423 = vmatmul.f32.gmra.mxu0 %v402
    %v424 = vpop.f32.mrf.mxu0
    %v425 = vadd.f32 %v396, %v424
    %426 = vdwg.mxu0
    %427 = vrot.lane.b32.xlu0 %v160, 112
    %v428 = vpop.permute.xlu0 %427
    %429 = vrot.lane.b32.xlu0 %v163, 112
    %v430 = vpop.permute.xlu0 %429
    %431 = vrot.lane.b32.xlu0 %v160, 80
    %v432 = vpop.permute.xlu0 %431
    %433 = vrot.lane.b32.xlu0 %v163, 80
    %v434 = vpop.permute.xlu0 %433
    %v435 = vsel %vm175, %v428, 0
    %v437 = vsel %vm175, %v430, 0
    %v439 = vsel %vm175, %v432, 0
    %v441 = vsel %vm175, %v434, 0
    %443 = vmatpush.xpose.msra.mxu0 0.0
    %444 = vmatpush.xpose.msra.mxu0 0.0
    %445 = vmatpush.xpose.msra.mxu0 0.0
    %446 = vmatpush.xpose.msra.mxu0 0.0
    %447 = vmatpush.xpose.msra.mxu0 0.0
    %448 = vmatpush.xpose.msra.mxu0 0.0
    %449 = vmatpush.xpose.msra.mxu0 0.0
    %450 = vmatpush.xpose.msra.mxu0 0.0
    %451 = vmatpush.xpose.msra.mxu0 0.0
    %452 = vmatpush.xpose.msra.mxu0 0.0
    %453 = vmatpush.xpose.msra.mxu0 0.0
    %454 = vmatpush.xpose.msra.mxu0 0.0
    %455 = vmatpush.xpose.msra.mxu0 0.0
    %456 = vmatpush.xpose.msra.mxu0 0.0
    %457 = vmatpush.xpose.msra.mxu0 %v441
    %458 = vmatpush.xpose.msra.mxu0 %v439
    %459 = vmatmul.f32.gmra.mxu0 %v435
    %v460 = vpop.f32.mrf.mxu0
    %v461 = vadd.f32 0.0, %v460
    %462 = vmatmul.f32.gmra.mxu0 %v437
    %v463 = vpop.f32.mrf.mxu0
    %v464 = vadd.f32 0.0, %v463
    %465 = vdwg.mxu0
    %v466 = vmul.f32 %v461, 0.35355338
    %v467 = vmul.f32 %v464, 0.35355338
    %v468 = vadd.f32 %v466, %v68
    %v469 = vadd.f32 %v467, %v69
    %v470 = vsel %vm211, %v468, -inf
    %471 = vmax.xlane.f32.xlu0 %v470
    %v472 = vpop.xlane.xlu0 %471
    %v473 = vsel %vm211, %v469, -inf
    %474 = vmax.xlane.f32.xlu0 %v473
    %v475 = vpop.xlane.xlu0 %474
    %v476 = vsub.f32 %v468, %v472
    %v477 = vsub.f32 %v469, %v475
    %v478 = vmul.f32 %v476, 1.442695
    %v479 = vpow.pop %v478
    %v480 = vmul.f32 %v477, 1.442695
    %v481 = vpow.pop %v480
    %v482 = vsel %vm211, %v479, 0.0
    %483 = vadd.xlane.f32.xlu0 %v482
    %v484 = vpop.xlane.xlu0 %483
    %v485 = vsel %vm211, %v481, 0.0
    %486 = vadd.xlane.f32.xlu0 %v485
    %v487 = vpop.xlane.xlu0 %486
    %v488 = vrcp.pop %v484
    %v489 = vrcp.pop %v487
    %v490 = vmul.f32 %v479, %v488
    %v491 = vmul.f32 %v481, %v489
    %492 = vrot.lane.b32.xlu0 %v160, 48
    %v493 = vpop.permute.xlu0 %492
    %494 = vrot.lane.b32.xlu0 %v163, 48
    %v495 = vpop.permute.xlu0 %494
    %v499 = vsel %vm211, %v490, 0
    %v502 = vsel %vm211, %v491, 0
    %504 = vmatpush.msra.mxu0 0.0
    %505 = vmatpush.msra.mxu0 0.0
    %506 = vmatpush.msra.mxu0 0.0
    %507 = vmatpush.msra.mxu0 0.0
    %508 = vmatpush.msra.mxu0 0.0
    %509 = vmatpush.msra.mxu0 0.0
    %510 = vmatpush.msra.mxu0 0.0
    %511 = vmatpush.msra.mxu0 0.0
    %512 = vmatpush.msra.mxu0 0.0
    %513 = vmatpush.msra.mxu0 0.0
    %514 = vmatpush.msra.mxu0 0.0
    %515 = vmatpush.msra.mxu0 0.0
    %516 = vmatpush.msra.mxu0 0.0
    %517 = vmatpush.msra.mxu0 0.0
    %518 = vmatpush.msra.mxu0 %v495
    %519 = vmatpush.msra.mxu0 %v493
    %520 = vmatmul.f32.gmra.mxu0 %v499
    %v521 = vpop.f32.mrf.mxu0
    %v522 = vadd.f32 0.0, %v521
    %523 = vmatmul.f32.gmra.mxu0 %v502
    %v524 = vpop.f32.mrf.mxu0
    %v525 = vadd.f32 0.0, %v524
    %526 = vdwg.mxu0
    %v528 = vsel %vm175, %v522, 0
    %v531 = vsel %vm175, %v525, 0
    %533 = vmatpush.msra.mxu0 0.0
    %534 = vmatpush.msra.mxu0 0.0
    %535 = vmatpush.msra.mxu0 0.0
    %536 = vmatpush.msra.mxu0 0.0
    %537 = vmatpush.msra.mxu0 0.0
    %538 = vmatpush.msra.mxu0 0.0
    %539 = vmatpush.msra.mxu0 0.0
    %540 = vmatpush.msra.mxu0 0.0
    %541 = vmatpush.msra.mxu0 0.0
    %542 = vmatpush.msra.mxu0 0.0
    %543 = vmatpush.msra.mxu0 0.0
    %544 = vmatpush.msra.mxu0 0.0
    %545 = vmatpush.msra.mxu0 0.0
    %546 = vmatpush.msra.mxu0 0.0
    %547 = vmatpush.msra.mxu0 0.0
    %548 = vmatpush.msra.mxu0 %v167
    %549 = vmatmul.f32.gmra.mxu0 %v528
    %v550 = vpop.f32.mrf.mxu0
    %v551 = vadd.f32 0.0, %v550
    %552 = vmatmul.f32.gmra.mxu0 %v531
    %v553 = vpop.f32.mrf.mxu0
    %v554 = vadd.f32 0.0, %v553
    %555 = vdwg.mxu0
    %v556 = vadd.f32 %v422, %v551
    %v557 = vadd.f32 %v425, %v554
    %558 = vrot.lane.b32.xlu0 %v160, 104
    %v559 = vpop.permute.xlu0 %558
    %560 = vrot.lane.b32.xlu0 %v163, 104
    %v561 = vpop.permute.xlu0 %560
    %562 = vrot.lane.b32.xlu0 %v160, 72
    %v563 = vpop.permute.xlu0 %562
    %564 = vrot.lane.b32.xlu0 %v163, 72
    %v565 = vpop.permute.xlu0 %564
    %v566 = vsel %vm175, %v559, 0
    %v568 = vsel %vm175, %v561, 0
    %v570 = vsel %vm175, %v563, 0
    %v572 = vsel %vm175, %v565, 0
    %574 = vmatpush.xpose.msra.mxu0 0.0
    %575 = vmatpush.xpose.msra.mxu0 0.0
    %576 = vmatpush.xpose.msra.mxu0 0.0
    %577 = vmatpush.xpose.msra.mxu0 0.0
    %578 = vmatpush.xpose.msra.mxu0 0.0
    %579 = vmatpush.xpose.msra.mxu0 0.0
    %580 = vmatpush.xpose.msra.mxu0 0.0
    %581 = vmatpush.xpose.msra.mxu0 0.0
    %582 = vmatpush.xpose.msra.mxu0 0.0
    %583 = vmatpush.xpose.msra.mxu0 0.0
    %584 = vmatpush.xpose.msra.mxu0 0.0
    %585 = vmatpush.xpose.msra.mxu0 0.0
    %586 = vmatpush.xpose.msra.mxu0 0.0
    %587 = vmatpush.xpose.msra.mxu0 0.0
    %588 = vmatpush.xpose.msra.mxu0 %v572
    %589 = vmatpush.xpose.msra.mxu0 %v570
    %590 = vmatmul.f32.gmra.mxu0 %v566
    %v591 = vpop.f32.mrf.mxu0
    %v592 = vadd.f32 0.0, %v591
    %593 = vmatmul.f32.gmra.mxu0 %v568
    %v594 = vpop.f32.mrf.mxu0
    %v595 = vadd.f32 0.0, %v594
    %596 = vdwg.mxu0
    %v597 = vmul.f32 %v592, 0.35355338
    %v598 = vmul.f32 %v595, 0.35355338
    %v599 = vadd.f32 %v597, %v68
    %v600 = vadd.f32 %v598, %v69
    %v601 = vsel %vm211, %v599, -inf
    %602 = vmax.xlane.f32.xlu0 %v601
    %v603 = vpop.xlane.xlu0 %602
    %v604 = vsel %vm211, %v600, -inf
    %605 = vmax.xlane.f32.xlu0 %v604
    %v606 = vpop.xlane.xlu0 %605
    %v607 = vsub.f32 %v599, %v603
    %v608 = vsub.f32 %v600, %v606
    %v609 = vmul.f32 %v607, 1.442695
    %v610 = vpow.pop %v609
    %v611 = vmul.f32 %v608, 1.442695
    %v612 = vpow.pop %v611
    %v613 = vsel %vm211, %v610, 0.0
    %614 = vadd.xlane.f32.xlu0 %v613
    %v615 = vpop.xlane.xlu0 %614
    %v616 = vsel %vm211, %v612, 0.0
    %617 = vadd.xlane.f32.xlu0 %v616
    %v618 = vpop.xlane.xlu0 %617
    %v619 = vrcp.pop %v615
    %v620 = vrcp.pop %v618
    %v621 = vmul.f32 %v610, %v619
    %v622 = vmul.f32 %v612, %v620
    %623 = vrot.lane.b32.xlu0 %v160, 40
    %v624 = vpop.permute.xlu0 %623
    %625 = vrot.lane.b32.xlu0 %v163, 40
    %v626 = vpop.permute.xlu0 %625
    %v630 = vsel %vm211, %v621, 0
    %v633 = vsel %vm211, %v622, 0
    %635 = vmatpush.msra.mxu0 0.0
    %636 = vmatpush.msra.mxu0 0.0
    %637 = vmatpush.msra.mxu0 0.0
    %638 = vmatpush.msra.mxu0 0.0
    %639 = vmatpush.msra.mxu0 0.0
    %640 = vmatpush.msra.mxu0 0.0
    %641 = vmatpush.msra.mxu0 0.0
    %642 = vmatpush.msra.mxu0 0.0
    %643 = vmatpush.msra.mxu0 0.0
    %644 = vmatpush.msra.mxu0 0.0
    %645 = vmatpush.msra.mxu0 0.0
    %646 = vmatpush.msra.mxu0 0.0
    %647 = vmatpush.msra.mxu0 0.0
    %648 = vmatpush.msra.mxu0 0.0
    %649 = vmatpush.msra.mxu0 %v626
    %650 = vmatpush.msra.mxu0 %v624
    %651 = vmatmul.f32.gmra.mxu0 %v630
    %v652 = vpop.f32.mrf.mxu0
    %v653 = vadd.f32 0.0, %v652
    %654 = vmatmul.f32.gmra.mxu0 %v633
    %v655 = vpop.f32.mrf.mxu0
    %v656 = vadd.f32 0.0, %v655
    %657 = vdwg.mxu0
    %v659 = vsel %vm175, %v653, 0
    %v662 = vsel %vm175, %v656, 0
    %664 = vmatpush.msra.mxu0 0.0
    %665 = vmatpush.msra.mxu0 0.0
    %666 = vmatpush.msra.mxu0 0.0
    %667 = vmatpush.msra.mxu0 0.0
    %668 = vmatpush.msra.mxu0 0.0
    %669 = vmatpush.msra.mxu0 0.0
    %670 = vmatpush.msra.mxu0 0.0
    %671 = vmatpush.msra.mxu0 0.0
    %672 = vmatpush.msra.mxu0 0.0
    %673 = vmatpush.msra.mxu0 0.0
    %674 = vmatpush.msra.mxu0 0.0
    %675 = vmatpush.msra.mxu0 0.0
    %676 = vmatpush.msra.mxu0 0.0
    %677 = vmatpush.msra.mxu0 0.0
    %678 = vmatpush.msra.mxu0 0.0
    %679 = vmatpush.msra.mxu0 %v168
    %680 = vmatmul.f32.gmra.mxu0 %v659
    %v681 = vpop.f32.mrf.mxu0
    %v682 = vadd.f32 0.0, %v681
    %683 = vmatmul.f32.gmra.mxu0 %v662
    %v684 = vpop.f32.mrf.mxu0
    %v685 = vadd.f32 0.0, %v684
    %686 = vdwg.mxu0
    %v687 = vadd.f32 %v556, %v682
    %v688 = vadd.f32 %v557, %v685
    %v689 = vld [vmem:[%s9] sm:$0x1]
    %v691 = vperm.slane %v689, 0
    %v693 = vadd.f32 %v687, %v691
    %v694 = vadd.f32 %v688, %v691
    %v695 = vadd.f32 %v122, %v693
    %v696 = vadd.f32 %v125, %v694
    %v697 = vld [vmem:[%s10] sm:$0x1]
    %v698 = vld [vmem:[%s11] sm:$0x1]
    %v699 = vsel %vm135, %v695, 0.0
    %700 = vadd.xlane.f32.xlu0 %v699
    %v701 = vpop.xlane.xlu0 %700
    %v702 = vsel %vm135, %v696, 0.0
    %703 = vadd.xlane.f32.xlu0 %v702
    %v704 = vpop.xlane.xlu0 %703
    %v705 = vrcp.pop 32.0
    %v706 = vmul.f32 32.0, %v705
    %v707 = vsub.f32 1.0, %v706
    %v708 = vmul.f32 %v705, %v707
    %v709 = vadd.f32 %v705, %v708
    %vm710 = vweird.f32 %v705
    %v711 = vsel %vm710, %v705, %v709
    %v712 = vmul.f32 %v701, %v711
    %v713 = vmul.f32 %v704, %v711
    %v714 = vsub.f32 %v695, %v712
    %v715 = vsub.f32 %v696, %v713
    %v716 = vmul.f32 %v714, %v714
    %v717 = vmul.f32 %v715, %v715
    %v718 = vsel %vm135, %v716, 0.0
    %719 = vadd.xlane.f32.xlu0 %v718
    %v720 = vpop.xlane.xlu0 %719
    %v721 = vsel %vm135, %v717, 0.0
    %722 = vadd.xlane.f32.xlu0 %v721
    %v723 = vpop.xlane.xlu0 %722
    %v724 = vmul.f32 %v720, %v711
    %v725 = vmul.f32 %v723, %v711
    %v726 = vadd.f32 %v724, 1e-05
    %v727 = vadd.f32 %v725, 1e-05
    %v728 = vrsqrt.pop %v726
    %v729 = vmul.f32 %v728, %v726
    %v730 = vmul.f32 %v729, %v728
    %v731 = vmul.f32 0.5, %v730
    %v732 = vsub.f32 1.5, %v731
    %v733 = vmul.f32 %v728, %v732
    %vm734 = vweird.f32 %v726
    %vm735 = vweird.f32 %v728
    %vm736 = vmor %vm734, %vm735
    %v737 = vsel %vm736, %v728, %v733
    %v738 = vrsqrt.pop %v727
    %v739 = vmul.f32 %v738, %v727
    %v740 = vmul.f32 %v739, %v738
    %v741 = vmul.f32 0.5, %v740
    %v742 = vsub.f32 1.5, %v741
    %v743 = vmul.f32 %v738, %v742
    %vm744 = vweird.f32 %v727
    %vm745 = vweird.f32 %v738
    %vm746 = vmor %vm744, %vm745
    %v747 = vsel %vm746, %v738, %v743
    %v748 = vmul.f32 %v714, %v737
    %v749 = vmul.f32 %v715, %v747
    %v751 = vperm.slane %v697, 0
    %v753 = vmul.f32 %v748, %v751
    %v754 = vmul.f32 %v749, %v751
    %v756 = vperm.slane %v698, 0
    %v758 = vadd.f32 %v753, %v756
    %v759 = vadd.f32 %v754, %v756
    %v760 = vld [vmem:[%s12] sm:$0xff]
    %v761 = vld [vmem:[%s12 + $0x8] sm:$0xff]
    %v762 = vld [vmem:[%s12 + $0x10] sm:$0xff]
    %v763 = vld [vmem:[%s12 + $0x18] sm:$0xff]
    %v764 = vld [vmem:[%s12 + $0x20] sm:$0xff]
    %v765 = vld [vmem:[%s12 + $0x28] sm:$0xff]
    %v766 = vld [vmem:[%s12 + $0x30] sm:$0xff]
    %v767 = vld [vmem:[%s12 + $0x38] sm:$0xff]
    %v768 = vld [vmem:[%s13] sm:$0x3]
    %v770 = vperm.slane %v768, 0
    %v771 = vperm.slane %v768, 1
    %v775 = vsel %vm135, %v758, 0
    %v778 = vsel %vm135, %v759, 0
    %780 = vmatpush.msra.mxu0 0.0
    %781 = vmatpush.msra.mxu0 0.0
    %782 = vmatpush.msra.mxu0 0.0
    %783 = vmatpush.msra.mxu0 0.0
    %784 = vmatpush.msra.mxu0 0.0
    %785 = vmatpush.msra.mxu0 0.0
    %786 = vmatpush.msra.mxu0 0.0
    %787 = vmatpush.msra.mxu0 0.0
    %788 = vmatpush.msra.mxu0 0.0
    %789 = vmatpush.msra.mxu0 0.0
    %790 = vmatpush.msra.mxu0 0.0
    %791 = vmatpush.msra.mxu0 0.0
    %792 = vmatpush.msra.mxu0 %v766
    %793 = vmatpush.msra.mxu0 %v764
    %794 = vmatpush.msra.mxu0 %v762
    %795 = vmatpush.msra.mxu0 %v760
    %796 = vmatmul.f32.gmra.mxu0 %v775
    %v797 = vpop.f32.mrf.mxu0
    %v798 = vadd.f32 %v770, %v797
    %799 = vmatmul.f32.gmra.mxu0 %v778
    %v800 = vpop.f32.mrf.mxu0
    %v801 = vadd.f32 %v770, %v800
    %802 = vdwg.mxu0
    %803 = vmatpush.msra.mxu0 0.0
    %804 = vmatpush.msra.mxu0 0.0
    %805 = vmatpush.msra.mxu0 0.0
    %806 = vmatpush.msra.mxu0 0.0
    %807 = vmatpush.msra.mxu0 0.0
    %808 = vmatpush.msra.mxu0 0.0
    %809 = vmatpush.msra.mxu0 0.0
    %810 = vmatpush.msra.mxu0 0.0
    %811 = vmatpush.msra.mxu0 0.0
    %812 = vmatpush.msra.mxu0 0.0
    %813 = vmatpush.msra.mxu0 0.0
    %814 = vmatpush.msra.mxu0 0.0
    %815 = vmatpush.msra.mxu0 %v767
    %816 = vmatpush.msra.mxu0 %v765
    %817 = vmatpush.msra.mxu0 %v763
    %818 = vmatpush.msra.mxu0 %v761
    %819 = vmatmul.f32.gmra.mxu0 %v775
    %v820 = vpop.f32.mrf.mxu0
    %v821 = vadd.f32 %v771, %v820
    %822 = vmatmul.f32.gmra.mxu0 %v778
    %v823 = vpop.f32.mrf.mxu0
    %v824 = vadd.f32 %v771, %v823
    %825 = vdwg.mxu0
    %v826 = vmax.f32 %v798, 0.0
    %v827 = vmax.f32 %v821, 0.0
    %v828 = vmax.f32 %v801, 0.0
    %v829 = vmax.f32 %v824, 0.0
    %v830 = vld [vmem:[%s14] sm:$0xff]
    %v831 = vld [vmem:[%s14 + $0x8] sm:$0xff]
    %v832 = vld [vmem:[%s14 + $0x10] sm:$0xff]
    %v833 = vld [vmem:[%s14 + $0x18] sm:$0xff]
    %v834 = vld [vmem:[%s14 + $0x20] sm:$0xff]
    %v835 = vld [vmem:[%s14 + $0x28] sm:$0xff]
    %v836 = vld [vmem:[%s14 + $0x30] sm:$0xff]
    %v837 = vld [vmem:[%s14 + $0x38] sm:$0xff]
    %v838 = vld [vmem:[%s14 + $0x40] sm:$0xff]
    %v839 = vld [vmem:[%s14 + $0x48] sm:$0xff]
    %v840 = vld [vmem:[%s14 + $0x50] sm:$0xff]
    %v841 = vld [vmem:[%s14 + $0x58] sm:$0xff]
    %v842 = vld [vmem:[%s14 + $0x60] sm:$0xff]
    %v843 = vld [vmem:[%s14 + $0x68] sm:$0xff]
    %v844 = vld [vmem:[%s14 + $0x70] sm:$0xff]
    %v845 = vld [vmem:[%s14 + $0x78] sm:$0xff]
    %v846 = vld [vmem:[%s14 + $0x80] sm:$0xff]
    %v847 = vld [vmem:[%s14 + $0x88] sm:$0xff]
    %v848 = vld [vmem:[%s14 + $0x90] sm:$0xff]
    %v849 = vld [vmem:[%s14 + $0x98] sm:$0xff]
    %v850 = vld [vmem:[%s14 + $0xa0] sm:$0xff]
    %v851 = vld [vmem:[%s14 + $0xa8] sm:$0xff]
    %v852 = vld [vmem:[%s14 + $0xb0] sm:$0xff]
    %v853 = vld [vmem:[%s14 + $0xb8] sm:$0xff]
    %v854 = vld [vmem:[%s14 + $0xc0] sm:$0xff]
    %v855 = vld [vmem:[%s14 + $0xc8] sm:$0xff]
    %v856 = vld [vmem:[%s14 + $0xd0] sm:$0xff]
    %v857 = vld [vmem:[%s14 + $0xd8] sm:$0xff]
    %v858 = vld [vmem:[%s14 + $0xe0] sm:$0xff]
    %v859 = vld [vmem:[%s14 + $0xe8] sm:$0xff]
    %v860 = vld [vmem:[%s14 + $0xf0] sm:$0xff]
    %v861 = vld [vmem:[%s14 + $0xf8] sm:$0xff]
    %v862 = vld [vmem:[%s15] sm:$0x1]
    %v864 = vperm.slane %v862, 0
    %866 = vmatpush.msra.mxu0 %v845
    %867 = vmatpush.msra.mxu0 %v844
    %868 = vmatpush.msra.mxu0 %v843
    %869 = vmatpush.msra.mxu0 %v842
    %870 = vmatpush.msra.mxu0 %v841
    %871 = vmatpush.msra.mxu0 %v840
    %872 = vmatpush.msra.mxu0 %v839
    %873 = vmatpush.msra.mxu0 %v838
    %874 = vmatpush.msra.mxu0 %v837
    %875 = vmatpush.msra.mxu0 %v836
    %876 = vmatpush.msra.mxu0 %v835
    %877 = vmatpush.msra.mxu0 %v834
    %878 = vmatpush.msra.mxu0 %v833
    %879 = vmatpush.msra.mxu0 %v832
    %880 = vmatpush.msra.mxu0 %v831
    %881 = vmatpush.msra.mxu0 %v830
    %882 = vmatmul.f32.gmra.mxu0 %v826
    %v883 = vpop.f32.mrf.mxu0
    %v884 = vadd.f32 %v864, %v883
    %885 = vmatmul.f32.gmra.mxu0 %v828
    %v886 = vpop.f32.mrf.mxu0
    %v887 = vadd.f32 %v864, %v886
    %888 = vdwg.mxu0
    %889 = vmatpush.msra.mxu0 %v861
    %890 = vmatpush.msra.mxu0 %v860
    %891 = vmatpush.msra.mxu0 %v859
    %892 = vmatpush.msra.mxu0 %v858
    %893 = vmatpush.msra.mxu0 %v857
    %894 = vmatpush.msra.mxu0 %v856
    %895 = vmatpush.msra.mxu0 %v855
    %896 = vmatpush.msra.mxu0 %v854
    %897 = vmatpush.msra.mxu0 %v853
    %898 = vmatpush.msra.mxu0 %v852
    %899 = vmatpush.msra.mxu0 %v851
    %900 = vmatpush.msra.mxu0 %v850
    %901 = vmatpush.msra.mxu0 %v849
    %902 = vmatpush.msra.mxu0 %v848
    %903 = vmatpush.msra.mxu0 %v847
    %904 = vmatpush.msra.mxu0 %v846
    %905 = vmatmul.f32.gmra.mxu0 %v827
    %v906 = vpop.f32.mrf.mxu0
    %v907 = vadd.f32 %v884, %v906
    %908 = vmatmul.f32.gmra.mxu0 %v829
    %v909 = vpop.f32.mrf.mxu0
    %v910 = vadd.f32 %v887, %v909
    %911 = vdwg.mxu0
    %v912 = vadd.f32 %v758, %v907
    %v913 = vadd.f32 %v759, %v910
    %v914 = vld [vmem:[%s16] sm:$0x1]
    %v915 = vld [vmem:[%s17] sm:$0x1]
    %v916 = vsel %vm135, %v912, 0.0
    %917 = vadd.xlane.f32.xlu0 %v916
    %v918 = vpop.xlane.xlu0 %917
    %v919 = vsel %vm135, %v913, 0.0
    %920 = vadd.xlane.f32.xlu0 %v919
    %v921 = vpop.xlane.xlu0 %920
    %v922 = vmul.f32 %v918, %v711
    %v923 = vmul.f32 %v921, %v711
    %v924 = vsub.f32 %v912, %v922
    %v925 = vsub.f32 %v913, %v923
    %v926 = vmul.f32 %v924, %v924
    %v927 = vmul.f32 %v925, %v925
    %v928 = vsel %vm135, %v926, 0.0
    %929 = vadd.xlane.f32.xlu0 %v928
    %v930 = vpop.xlane.xlu0 %929
    %v931 = vsel %vm135, %v927, 0.0
    %932 = vadd.xlane.f32.xlu0 %v931
    %v933 = vpop.xlane.xlu0 %932
    %v934 = vmul.f32 %v930, %v711
    %v935 = vmul.f32 %v933, %v711
    %v936 = vadd.f32 %v934, 1e-05
    %v937 = vadd.f32 %v935, 1e-05
    %v938 = vrsqrt.pop %v936
    %v939 = vmul.f32 %v938, %v936
    %v940 = vmul.f32 %v939, %v938
    %v941 = vmul.f32 0.5, %v940
    %v942 = vsub.f32 1.5, %v941
    %v943 = vmul.f32 %v938, %v942
    %vm944 = vweird.f32 %v936
    %vm945 = vweird.f32 %v938
    %vm946 = vmor %vm944, %vm945
    %v947 = vsel %vm946, %v938, %v943
    %v948 = vrsqrt.pop %v937
    %v949 = vmul.f32 %v948, %v937
    %v950 = vmul.f32 %v949, %v948
    %v951 = vmul.f32 0.5, %v950
    %v952 = vsub.f32 1.5, %v951
    %v953 = vmul.f32 %v948, %v952
    %vm954 = vweird.f32 %v937
    %vm955 = vweird.f32 %v948
    %vm956 = vmor %vm954, %vm955
    %v957 = vsel %vm956, %v948, %v953
    %v958 = vmul.f32 %v924, %v947
    %v959 = vmul.f32 %v925, %v957
    %v961 = vperm.slane %v914, 0
    %v963 = vmul.f32 %v958, %v961
    %v964 = vmul.f32 %v959, %v961
    %v966 = vperm.slane %v915, 0
    %v968 = vadd.f32 %v963, %v966
    %v969 = vadd.f32 %v964, %v966
    %s970 = scalar_lea.vmem %s6, 32
    %v971 = vld [vmem:[%s970] sm:$0xff]
    %v972 = vld [vmem:[%s970 + $0x8] sm:$0xff]
    %v973 = vld [vmem:[%s970 + $0x10] sm:$0xff]
    %v974 = vld [vmem:[%s970 + $0x18] sm:$0xff]
    %s975 = scalar_lea.vmem %s7, 1
    %v976 = vld [vmem:[%s975] sm:$0x1]
    %v978 = vperm.slane %v976, 0
    %v981 = vsel %vm135, %v968, 0
    %v984 = vsel %vm135, %v969, 0
    %986 = vmatpush.msra.mxu0 0.0
    %987 = vmatpush.msra.mxu0 0.0
    %988 = vmatpush.msra.mxu0 0.0
    %989 = vmatpush.msra.mxu0 0.0
    %990 = vmatpush.msra.mxu0 0.0
    %991 = vmatpush.msra.mxu0 0.0
    %992 = vmatpush.msra.mxu0 0.0
    %993 = vmatpush.msra.mxu0 0.0
    %994 = vmatpush.msra.mxu0 0.0
    %995 = vmatpush.msra.mxu0 0.0
    %996 = vmatpush.msra.mxu0 0.0
    %997 = vmatpush.msra.mxu0 0.0
    %998 = vmatpush.msra.mxu0 %v974
    %999 = vmatpush.msra.mxu0 %v973
    %1000 = vmatpush.msra.mxu0 %v972
    %1001 = vmatpush.msra.mxu0 %v971
    %1002 = vmatmul.f32.gmra.mxu0 %v981
    %v1003 = vpop.f32.mrf.mxu0
    %v1004 = vadd.f32 %v978, %v1003
    %1005 = vmatmul.f32.gmra.mxu0 %v984
    %v1006 = vpop.f32.mrf.mxu0
    %v1007 = vadd.f32 %v978, %v1006
    %1008 = vdwg.mxu0
    %v1010 = vrot.slane %v1007, 7
    %vm1012 = vcmask 1040384
    %v1013 = vsel %vm1012, %v1004, %v1010
    %v1014 = vrot.slane %v969, 7
    %v1016 = vsel %vm1012, %v968, %v1014
    %s1017 = scalar_lea.vmem %s8, 32
    %v1018 = vld [vmem:[%s1017] sm:$0xff]
    %v1019 = vld [vmem:[%s1017 + $0x8] sm:$0xff]
    %v1020 = vld [vmem:[%s1017 + $0x10] sm:$0xff]
    %v1021 = vld [vmem:[%s1017 + $0x18] sm:$0xff]
    %1023 = vrot.lane.b32.xlu0 %v1004, 96
    %v1024 = vpop.permute.xlu0 %1023
    %1025 = vrot.lane.b32.xlu0 %v1007, 96
    %v1026 = vpop.permute.xlu0 %1025
    %v1028 = vsel %vm175, %v1013, 0
    %v1030 = vsel %vm175, %v1024, 0
    %v1032 = vsel %vm175, %v1026, 0
    %1034 = vmatpush.xpose.msra.mxu0 0.0
    %1035 = vmatpush.xpose.msra.mxu0 0.0
    %1036 = vmatpush.xpose.msra.mxu0 0.0
    %1037 = vmatpush.xpose.msra.mxu0 0.0
    %1038 = vmatpush.xpose.msra.mxu0 0.0
    %1039 = vmatpush.xpose.msra.mxu0 0.0
    %1040 = vmatpush.xpose.msra.mxu0 0.0
    %1041 = vmatpush.xpose.msra.mxu0 0.0
    %1042 = vmatpush.xpose.msra.mxu0 0.0
    %1043 = vmatpush.xpose.msra.mxu0 0.0
    %1044 = vmatpush.xpose.msra.mxu0 0.0
    %1045 = vmatpush.xpose.msra.mxu0 0.0
    %1046 = vmatpush.xpose.msra.mxu0 0.0
    %1047 = vmatpush.xpose.msra.mxu0 0.0
    %1048 = vmatpush.xpose.msra.mxu0 %v1032
    %1049 = vmatpush.xpose.msra.mxu0 %v1030
    %1050 = vmatmul.f32.gmra.mxu0 %v1028
    %v1051 = vpop.f32.mrf.mxu0
    %v1052 = vadd.f32 0.0, %v1051
    %1053 = vdwg.mxu0
    %v1054 = vmul.f32 %v1052, 0.35355338
    %v1055 = vadd.f32 %v1054, %v71
    %vm1056 = vcmask 123904
    %v1057 = vsel %vm1056, %v1055, -inf
    %1058 = vmax.xlane.f32.xlu0 %v1057
    %v1059 = vpop.xlane.xlu0 %1058
    %v1060 = vsub.f32 %v1055, %v1059
    %v1061 = vmul.f32 %v1060, 1.442695
    %v1062 = vpow.pop %v1061
    %v1063 = vsel %vm1056, %v1062, 0.0
    %1064 = vadd.xlane.f32.xlu0 %v1063
    %v1065 = vpop.xlane.xlu0 %1064
    %v1066 = vrcp.pop %v1065
    %v1067 = vmul.f32 %v1062, %v1066
    %1068 = vrot.lane.b32.xlu0 %v1004, 64
    %v1069 = vpop.permute.xlu0 %1068
    %1070 = vrot.lane.b32.xlu0 %v1007, 64
    %v1071 = vpop.permute.xlu0 %1070
    %v1075 = vsel %vm211, %v1067, 0
    %1077 = vmatpush.msra.mxu0 0.0
    %1078 = vmatpush.msra.mxu0 0.0
    %1079 = vmatpush.msra.mxu0 0.0
    %1080 = vmatpush.msra.mxu0 0.0
    %1081 = vmatpush.msra.mxu0 0.0
    %1082 = vmatpush.msra.mxu0 0.0
    %1083 = vmatpush.msra.mxu0 0.0
    %1084 = vmatpush.msra.mxu0 0.0
    %1085 = vmatpush.msra.mxu0 0.0
    %1086 = vmatpush.msra.mxu0 0.0
    %1087 = vmatpush.msra.mxu0 0.0
    %1088 = vmatpush.msra.mxu0 0.0
    %1089 = vmatpush.msra.mxu0 0.0
    %1090 = vmatpush.msra.mxu0 0.0
    %1091 = vmatpush.msra.mxu0 %v1071
    %1092 = vmatpush.msra.mxu0 %v1069
    %1093 = vmatmul.f32.gmra.mxu0 %v1075
    %v1094 = vpop.f32.mrf.mxu0
    %v1095 = vadd.f32 0.0, %v1094
    %1096 = vdwg.mxu0
    %1097 = vrot.lane.b32.xlu0 %v1013, 120
    %v1098 = vpop.permute.xlu0 %1097
    %1099 = vrot.lane.b32.xlu0 %v1004, 88
    %v1100 = vpop.permute.xlu0 %1099
    %1101 = vrot.lane.b32.xlu0 %v1007, 88
    %v1102 = vpop.permute.xlu0 %1101
    %v1103 = vsel %vm175, %v1098, 0
    %v1105 = vsel %vm175, %v1100, 0
    %v1107 = vsel %vm175, %v1102, 0
    %1109 = vmatpush.xpose.msra.mxu0 0.0
    %1110 = vmatpush.xpose.msra.mxu0 0.0
    %1111 = vmatpush.xpose.msra.mxu0 0.0
    %1112 = vmatpush.xpose.msra.mxu0 0.0
    %1113 = vmatpush.xpose.msra.mxu0 0.0
    %1114 = vmatpush.xpose.msra.mxu0 0.0
    %1115 = vmatpush.xpose.msra.mxu0 0.0
    %1116 = vmatpush.xpose.msra.mxu0 0.0
    %1117 = vmatpush.xpose.msra.mxu0 0.0
    %1118 = vmatpush.xpose.msra.mxu0 0.0
    %1119 = vmatpush.xpose.msra.mxu0 0.0
    %1120 = vmatpush.xpose.msra.mxu0 0.0
    %1121 = vmatpush.xpose.msra.mxu0 0.0
    %1122 = vmatpush.xpose.msra.mxu0 0.0
    %1123 = vmatpush.xpose.msra.mxu0 %v1107
    %1124 = vmatpush.xpose.msra.mxu0 %v1105
    %1125 = vmatmul.f32.gmra.mxu0 %v1103
    %v1126 = vpop.f32.mrf.mxu0
    %v1127 = vadd.f32 0.0, %v1126
    %1128 = vdwg.mxu0
    %v1129 = vmul.f32 %v1127, 0.35355338
    %v1130 = vadd.f32 %v1129, %v71
    %v1131 = vsel %vm1056, %v1130, -inf
    %1132 = vmax.xlane.f32.xlu0 %v1131
    %v1133 = vpop.xlane.xlu0 %1132
    %v1134 = vsub.f32 %v1130, %v1133
    %v1135 = vmul.f32 %v1134, 1.442695
    %v1136 = vpow.pop %v1135
    %v1137 = vsel %vm1056, %v1136, 0.0
    %1138 = vadd.xlane.f32.xlu0 %v1137
    %v1139 = vpop.xlane.xlu0 %1138
    %v1140 = vrcp.pop %v1139
    %v1141 = vmul.f32 %v1136, %v1140
    %1142 = vrot.lane.b32.xlu0 %v1004, 56
    %v1143 = vpop.permute.xlu0 %1142
    %1144 = vrot.lane.b32.xlu0 %v1007, 56
    %v1145 = vpop.permute.xlu0 %1144
    %v1149 = vsel %vm211, %v1141, 0
    %1151 = vmatpush.msra.mxu0 0.0
    %1152 = vmatpush.msra.mxu0 0.0
    %1153 = vmatpush.msra.mxu0 0.0
    %1154 = vmatpush.msra.mxu0 0.0
    %1155 = vmatpush.msra.mxu0 0.0
    %1156 = vmatpush.msra.mxu0 0.0
    %1157 = vmatpush.msra.mxu0 0.0
    %1158 = vmatpush.msra.mxu0 0.0
    %1159 = vmatpush.msra.mxu0 0.0
    %1160 = vmatpush.msra.mxu0 0.0
    %1161 = vmatpush.msra.mxu0 0.0
    %1162 = vmatpush.msra.mxu0 0.0
    %1163 = vmatpush.msra.mxu0 0.0
    %1164 = vmatpush.msra.mxu0 0.0
    %1165 = vmatpush.msra.mxu0 %v1145
    %1166 = vmatpush.msra.mxu0 %v1143
    %1167 = vmatmul.f32.gmra.mxu0 %v1149
    %v1168 = vpop.f32.mrf.mxu0
    %v1169 = vadd.f32 0.0, %v1168
    %1170 = vdwg.mxu0
    %v1172 = vsel %vm175, %v1169, 0
    %1174 = vmatpush.msra.mxu0 0.0
    %1175 = vmatpush.msra.mxu0 0.0
    %1176 = vmatpush.msra.mxu0 0.0
    %1177 = vmatpush.msra.mxu0 0.0
    %1178 = vmatpush.msra.mxu0 0.0
    %1179 = vmatpush.msra.mxu0 0.0
    %1180 = vmatpush.msra.mxu0 0.0
    %1181 = vmatpush.msra.mxu0 0.0
    %1182 = vmatpush.msra.mxu0 0.0
    %1183 = vmatpush.msra.mxu0 0.0
    %1184 = vmatpush.msra.mxu0 0.0
    %1185 = vmatpush.msra.mxu0 0.0
    %1186 = vmatpush.msra.mxu0 0.0
    %1187 = vmatpush.msra.mxu0 0.0
    %1188 = vmatpush.msra.mxu0 0.0
    %1189 = vmatpush.msra.mxu0 %v1019
    %1190 = vmatmul.f32.gmra.mxu0 %v1172
    %v1191 = vpop.f32.mrf.mxu0
    %v1192 = vadd.f32 0.0, %v1191
    %1193 = vdwg.mxu0
    %v1195 = vsel %vm175, %v1095, 0
    %1197 = vmatpush.msra.mxu0 0.0
    %1198 = vmatpush.msra.mxu0 0.0
    %1199 = vmatpush.msra.mxu0 0.0
    %1200 = vmatpush.msra.mxu0 0.0
    %1201 = vmatpush.msra.mxu0 0.0
    %1202 = vmatpush.msra.mxu0 0.0
    %1203 = vmatpush.msra.mxu0 0.0
    %1204 = vmatpush.msra.mxu0 0.0
    %1205 = vmatpush.msra.mxu0 0.0
    %1206 = vmatpush.msra.mxu0 0.0
    %1207 = vmatpush.msra.mxu0 0.0
    %1208 = vmatpush.msra.mxu0 0.0
    %1209 = vmatpush.msra.mxu0 0.0
    %1210 = vmatpush.msra.mxu0 0.0
    %1211 = vmatpush.msra.mxu0 0.0
    %1212 = vmatpush.msra.mxu0 %v1018
    %1213 = vmatmul.f32.gmra.mxu0 %v1195
    %v1214 = vpop.f32.mrf.mxu0
    %v1215 = vadd.f32 %v1192, %v1214
    %1216 = vdwg.mxu0
    %1217 = vrot.lane.b32.xlu0 %v1013, 112
    %v1218 = vpop.permute.xlu0 %1217
    %1219 = vrot.lane.b32.xlu0 %v1004, 80
    %v1220 = vpop.permute.xlu0 %1219
    %1221 = vrot.lane.b32.xlu0 %v1007, 80
    %v1222 = vpop.permute.xlu0 %1221
    %v1223 = vsel %vm175, %v1218, 0
    %v1225 = vsel %vm175, %v1220, 0
    %v1227 = vsel %vm175, %v1222, 0
    %1229 = vmatpush.xpose.msra.mxu0 0.0
    %1230 = vmatpush.xpose.msra.mxu0 0.0
    %1231 = vmatpush.xpose.msra.mxu0 0.0
    %1232 = vmatpush.xpose.msra.mxu0 0.0
    %1233 = vmatpush.xpose.msra.mxu0 0.0
    %1234 = vmatpush.xpose.msra.mxu0 0.0
    %1235 = vmatpush.xpose.msra.mxu0 0.0
    %1236 = vmatpush.xpose.msra.mxu0 0.0
    %1237 = vmatpush.xpose.msra.mxu0 0.0
    %1238 = vmatpush.xpose.msra.mxu0 0.0
    %1239 = vmatpush.xpose.msra.mxu0 0.0
    %1240 = vmatpush.xpose.msra.mxu0 0.0
    %1241 = vmatpush.xpose.msra.mxu0 0.0
    %1242 = vmatpush.xpose.msra.mxu0 0.0
    %1243 = vmatpush.xpose.msra.mxu0 %v1227
    %1244 = vmatpush.xpose.msra.mxu0 %v1225
    %1245 = vmatmul.f32.gmra.mxu0 %v1223
    %v1246 = vpop.f32.mrf.mxu0
    %v1247 = vadd.f32 0.0, %v1246
    %1248 = vdwg.mxu0
    %v1249 = vmul.f32 %v1247, 0.35355338
    %v1250 = vadd.f32 %v1249, %v71
    %v1251 = vsel %vm1056, %v1250, -inf
    %1252 = vmax.xlane.f32.xlu0 %v1251
    %v1253 = vpop.xlane.xlu0 %1252
    %v1254 = vsub.f32 %v1250, %v1253
    %v1255 = vmul.f32 %v1254, 1.442695
    %v1256 = vpow.pop %v1255
    %v1257 = vsel %vm1056, %v1256, 0.0
    %1258 = vadd.xlane.f32.xlu0 %v1257
    %v1259 = vpop.xlane.xlu0 %1258
    %v1260 = vrcp.pop %v1259
    %v1261 = vmul.f32 %v1256, %v1260
    %1262 = vrot.lane.b32.xlu0 %v1004, 48
    %v1263 = vpop.permute.xlu0 %1262
    %1264 = vrot.lane.b32.xlu0 %v1007, 48
    %v1265 = vpop.permute.xlu0 %1264
    %v1269 = vsel %vm211, %v1261, 0
    %1271 = vmatpush.msra.mxu0 0.0
    %1272 = vmatpush.msra.mxu0 0.0
    %1273 = vmatpush.msra.mxu0 0.0
    %1274 = vmatpush.msra.mxu0 0.0
    %1275 = vmatpush.msra.mxu0 0.0
    %1276 = vmatpush.msra.mxu0 0.0
    %1277 = vmatpush.msra.mxu0 0.0
    %1278 = vmatpush.msra.mxu0 0.0
    %1279 = vmatpush.msra.mxu0 0.0
    %1280 = vmatpush.msra.mxu0 0.0
    %1281 = vmatpush.msra.mxu0 0.0
    %1282 = vmatpush.msra.mxu0 0.0
    %1283 = vmatpush.msra.mxu0 0.0
    %1284 = vmatpush.msra.mxu0 0.0
    %1285 = vmatpush.msra.mxu0 %v1265
    %1286 = vmatpush.msra.mxu0 %v1263
    %1287 = vmatmul.f32.gmra.mxu0 %v1269
    %v1288 = vpop.f32.mrf.mxu0
    %v1289 = vadd.f32 0.0, %v1288
    %1290 = vdwg.mxu0
    %v1292 = vsel %vm175, %v1289, 0
    %1294 = vmatpush.msra.mxu0 0.0
    %1295 = vmatpush.msra.mxu0 0.0
    %1296 = vmatpush.msra.mxu0 0.0
    %1297 = vmatpush.msra.mxu0 0.0
    %1298 = vmatpush.msra.mxu0 0.0
    %1299 = vmatpush.msra.mxu0 0.0
    %1300 = vmatpush.msra.mxu0 0.0
    %1301 = vmatpush.msra.mxu0 0.0
    %1302 = vmatpush.msra.mxu0 0.0
    %1303 = vmatpush.msra.mxu0 0.0
    %1304 = vmatpush.msra.mxu0 0.0
    %1305 = vmatpush.msra.mxu0 0.0
    %1306 = vmatpush.msra.mxu0 0.0
    %1307 = vmatpush.msra.mxu0 0.0
    %1308 = vmatpush.msra.mxu0 0.0
    %1309 = vmatpush.msra.mxu0 %v1020
    %1310 = vmatmul.f32.gmra.mxu0 %v1292
    %v1311 = vpop.f32.mrf.mxu0
    %v1312 = vadd.f32 0.0, %v1311
    %1313 = vdwg.mxu0
    %v1314 = vadd.f32 %v1215, %v1312
    %1315 = vrot.lane.b32.xlu0 %v1013, 104
    %v1316 = vpop.permute.xlu0 %1315
    %1317 = vrot.lane.b32.xlu0 %v1004, 72
    %v1318 = vpop.permute.xlu0 %1317
    %1319 = vrot.lane.b32.xlu0 %v1007, 72
    %v1320 = vpop.permute.xlu0 %1319
    %v1321 = vsel %vm175, %v1316, 0
    %v1323 = vsel %vm175, %v1318, 0
    %v1325 = vsel %vm175, %v1320, 0
    %1327 = vmatpush.xpose.msra.mxu0 0.0
    %1328 = vmatpush.xpose.msra.mxu0 0.0
    %1329 = vmatpush.xpose.msra.mxu0 0.0
    %1330 = vmatpush.xpose.msra.mxu0 0.0
    %1331 = vmatpush.xpose.msra.mxu0 0.0
    %1332 = vmatpush.xpose.msra.mxu0 0.0
    %1333 = vmatpush.xpose.msra.mxu0 0.0
    %1334 = vmatpush.xpose.msra.mxu0 0.0
    %1335 = vmatpush.xpose.msra.mxu0 0.0
    %1336 = vmatpush.xpose.msra.mxu0 0.0
    %1337 = vmatpush.xpose.msra.mxu0 0.0
    %1338 = vmatpush.xpose.msra.mxu0 0.0
    %1339 = vmatpush.xpose.msra.mxu0 0.0
    %1340 = vmatpush.xpose.msra.mxu0 0.0
    %1341 = vmatpush.xpose.msra.mxu0 %v1325
    %1342 = vmatpush.xpose.msra.mxu0 %v1323
    %1343 = vmatmul.f32.gmra.mxu0 %v1321
    %v1344 = vpop.f32.mrf.mxu0
    %v1345 = vadd.f32 0.0, %v1344
    %1346 = vdwg.mxu0
    %v1347 = vmul.f32 %v1345, 0.35355338
    %v1348 = vadd.f32 %v1347, %v71
    %v1349 = vsel %vm1056, %v1348, -inf
    %1350 = vmax.xlane.f32.xlu0 %v1349
    %v1351 = vpop.xlane.xlu0 %1350
    %v1352 = vsub.f32 %v1348, %v1351
    %v1353 = vmul.f32 %v1352, 1.442695
    %v1354 = vpow.pop %v1353
    %v1355 = vsel %vm1056, %v1354, 0.0
    %1356 = vadd.xlane.f32.xlu0 %v1355
    %v1357 = vpop.xlane.xlu0 %1356
    %v1358 = vrcp.pop %v1357
    %v1359 = vmul.f32 %v1354, %v1358
    %1360 = vrot.lane.b32.xlu0 %v1004, 40
    %v1361 = vpop.permute.xlu0 %1360
    %1362 = vrot.lane.b32.xlu0 %v1007, 40
    %v1363 = vpop.permute.xlu0 %1362
    %v1367 = vsel %vm211, %v1359, 0
    %1369 = vmatpush.msra.mxu0 0.0
    %1370 = vmatpush.msra.mxu0 0.0
    %1371 = vmatpush.msra.mxu0 0.0
    %1372 = vmatpush.msra.mxu0 0.0
    %1373 = vmatpush.msra.mxu0 0.0
    %1374 = vmatpush.msra.mxu0 0.0
    %1375 = vmatpush.msra.mxu0 0.0
    %1376 = vmatpush.msra.mxu0 0.0
    %1377 = vmatpush.msra.mxu0 0.0
    %1378 = vmatpush.msra.mxu0 0.0
    %1379 = vmatpush.msra.mxu0 0.0
    %1380 = vmatpush.msra.mxu0 0.0
    %1381 = vmatpush.msra.mxu0 0.0
    %1382 = vmatpush.msra.mxu0 0.0
    %1383 = vmatpush.msra.mxu0 %v1363
    %1384 = vmatpush.msra.mxu0 %v1361
    %1385 = vmatmul.f32.gmra.mxu0 %v1367
    %v1386 = vpop.f32.mrf.mxu0
    %v1387 = vadd.f32 0.0, %v1386
    %1388 = vdwg.mxu0
    %v1390 = vsel %vm175, %v1387, 0
    %1392 = vmatpush.msra.mxu0 0.0
    %1393 = vmatpush.msra.mxu0 0.0
    %1394 = vmatpush.msra.mxu0 0.0
    %1395 = vmatpush.msra.mxu0 0.0
    %1396 = vmatpush.msra.mxu0 0.0
    %1397 = vmatpush.msra.mxu0 0.0
    %1398 = vmatpush.msra.mxu0 0.0
    %1399 = vmatpush.msra.mxu0 0.0
    %1400 = vmatpush.msra.mxu0 0.0
    %1401 = vmatpush.msra.mxu0 0.0
    %1402 = vmatpush.msra.mxu0 0.0
    %1403 = vmatpush.msra.mxu0 0.0
    %1404 = vmatpush.msra.mxu0 0.0
    %1405 = vmatpush.msra.mxu0 0.0
    %1406 = vmatpush.msra.mxu0 0.0
    %1407 = vmatpush.msra.mxu0 %v1021
    %1408 = vmatmul.f32.gmra.mxu0 %v1390
    %v1409 = vpop.f32.mrf.mxu0
    %v1410 = vadd.f32 0.0, %v1409
    %1411 = vdwg.mxu0
    %v1412 = vadd.f32 %v1314, %v1410
    %s1413 = scalar_lea.vmem %s9, 1
    %v1414 = vld [vmem:[%s1413] sm:$0x1]
    %v1416 = vperm.slane %v1414, 0
    %v1418 = vadd.f32 %v1412, %v1416
    %v1419 = vadd.f32 %v1016, %v1418
    %s1420 = scalar_lea.vmem %s10, 1
    %v1421 = vld [vmem:[%s1420] sm:$0x1]
    %s1422 = scalar_lea.vmem %s11, 1
    %v1423 = vld [vmem:[%s1422] sm:$0x1]
    %vm1424 = vcmask 254976
    %v1425 = vsel %vm1424, %v1419, 0.0
    %1426 = vadd.xlane.f32.xlu0 %v1425
    %v1427 = vpop.xlane.xlu0 %1426
    %v1428 = vmul.f32 %v1427, %v711
    %v1429 = vsub.f32 %v1419, %v1428
    %v1430 = vmul.f32 %v1429, %v1429
    %v1431 = vsel %vm1424, %v1430, 0.0
    %1432 = vadd.xlane.f32.xlu0 %v1431
    %v1433 = vpop.xlane.xlu0 %1432
    %v1434 = vmul.f32 %v1433, %v711
    %v1435 = vadd.f32 %v1434, 1e-05
    %v1436 = vrsqrt.pop %v1435
    %v1437 = vmul.f32 %v1436, %v1435
    %v1438 = vmul.f32 %v1437, %v1436
    %v1439 = vmul.f32 0.5, %v1438
    %v1440 = vsub.f32 1.5, %v1439
    %v1441 = vmul.f32 %v1436, %v1440
    %vm1442 = vweird.f32 %v1435
    %vm1443 = vweird.f32 %v1436
    %vm1444 = vmor %vm1442, %vm1443
    %v1445 = vsel %vm1444, %v1436, %v1441
    %v1446 = vmul.f32 %v1429, %v1445
    %v1448 = vperm.slane %v1421, 0
    %v1450 = vmul.f32 %v1446, %v1448
    %v1452 = vperm.slane %v1423, 0
    %v1454 = vadd.f32 %v1450, %v1452
    %s1455 = scalar_lea.vmem %s12, 64
    %v1456 = vld [vmem:[%s1455] sm:$0xff]
    %v1457 = vld [vmem:[%s1455 + $0x8] sm:$0xff]
    %v1458 = vld [vmem:[%s1455 + $0x10] sm:$0xff]
    %v1459 = vld [vmem:[%s1455 + $0x18] sm:$0xff]
    %v1460 = vld [vmem:[%s1455 + $0x20] sm:$0xff]
    %v1461 = vld [vmem:[%s1455 + $0x28] sm:$0xff]
    %v1462 = vld [vmem:[%s1455 + $0x30] sm:$0xff]
    %v1463 = vld [vmem:[%s1455 + $0x38] sm:$0xff]
    %s1464 = scalar_lea.vmem %s13, 2
    %v1465 = vld [vmem:[%s1464] sm:$0x3]
    %v1467 = vperm.slane %v1465, 0
    %v1468 = vperm.slane %v1465, 1
    %v1472 = vsel %vm135, %v1454, 0
    %1474 = vmatpush.msra.mxu0 0.0
    %1475 = vmatpush.msra.mxu0 0.0
    %1476 = vmatpush.msra.mxu0 0.0
    %1477 = vmatpush.msra.mxu0 0.0
    %1478 = vmatpush.msra.mxu0 0.0
    %1479 = vmatpush.msra.mxu0 0.0
    %1480 = vmatpush.msra.mxu0 0.0
    %1481 = vmatpush.msra.mxu0 0.0
    %1482 = vmatpush.msra.mxu0 0.0
    %1483 = vmatpush.msra.mxu0 0.0
    %1484 = vmatpush.msra.mxu0 0.0
    %1485 = vmatpush.msra.mxu0 0.0
    %1486 = vmatpush.msra.mxu0 %v1462
    %1487 = vmatpush.msra.mxu0 %v1460
    %1488 = vmatpush.msra.mxu0 %v1458
    %1489 = vmatpush.msra.mxu0 %v1456
    %1490 = vmatmul.f32.gmra.mxu0 %v1472
    %v1491 = vpop.f32.mrf.mxu0
    %v1492 = vadd.f32 %v1467, %v1491
    %1493 = vdwg.mxu0
    %1494 = vmatpush.msra.mxu0 0.0
    %1495 = vmatpush.msra.mxu0 0.0
    %1496 = vmatpush.msra.mxu0 0.0
    %1497 = vmatpush.msra.mxu0 0.0
    %1498 = vmatpush.msra.mxu0 0.0
    %1499 = vmatpush.msra.mxu0 0.0
    %1500 = vmatpush.msra.mxu0 0.0
    %1501 = vmatpush.msra.mxu0 0.0
    %1502 = vmatpush.msra.mxu0 0.0
    %1503 = vmatpush.msra.mxu0 0.0
    %1504 = vmatpush.msra.mxu0 0.0
    %1505 = vmatpush.msra.mxu0 0.0
    %1506 = vmatpush.msra.mxu0 %v1463
    %1507 = vmatpush.msra.mxu0 %v1461
    %1508 = vmatpush.msra.mxu0 %v1459
    %1509 = vmatpush.msra.mxu0 %v1457
    %1510 = vmatmul.f32.gmra.mxu0 %v1472
    %v1511 = vpop.f32.mrf.mxu0
    %v1512 = vadd.f32 %v1468, %v1511
    %1513 = vdwg.mxu0
    %v1514 = vmax.f32 %v1492, 0.0
    %v1515 = vmax.f32 %v1512, 0.0
    %s1516 = scalar_lea.vmem %s14, 256
    %v1517 = vld [vmem:[%s1516] sm:$0xff]
    %v1518 = vld [vmem:[%s1516 + $0x8] sm:$0xff]
    %v1519 = vld [vmem:[%s1516 + $0x10] sm:$0xff]
    %v1520 = vld [vmem:[%s1516 + $0x18] sm:$0xff]
    %v1521 = vld [vmem:[%s1516 + $0x20] sm:$0xff]
    %v1522 = vld [vmem:[%s1516 + $0x28] sm:$0xff]
    %v1523 = vld [vmem:[%s1516 + $0x30] sm:$0xff]
    %v1524 = vld [vmem:[%s1516 + $0x38] sm:$0xff]
    %v1525 = vld [vmem:[%s1516 + $0x40] sm:$0xff]
    %v1526 = vld [vmem:[%s1516 + $0x48] sm:$0xff]
    %v1527 = vld [vmem:[%s1516 + $0x50] sm:$0xff]
    %v1528 = vld [vmem:[%s1516 + $0x58] sm:$0xff]
    %v1529 = vld [vmem:[%s1516 + $0x60] sm:$0xff]
    %v1530 = vld [vmem:[%s1516 + $0x68] sm:$0xff]
    %v1531 = vld [vmem:[%s1516 + $0x70] sm:$0xff]
    %v1532 = vld [vmem:[%s1516 + $0x78] sm:$0xff]
    %v1533 = vld [vmem:[%s1516 + $0x80] sm:$0xff]
    %v1534 = vld [vmem:[%s1516 + $0x88] sm:$0xff]
    %v1535 = vld [vmem:[%s1516 + $0x90] sm:$0xff]
    %v1536 = vld [vmem:[%s1516 + $0x98] sm:$0xff]
    %v1537 = vld [vmem:[%s1516 + $0xa0] sm:$0xff]
    %v1538 = vld [vmem:[%s1516 + $0xa8] sm:$0xff]
    %v1539 = vld [vmem:[%s1516 + $0xb0] sm:$0xff]
    %v1540 = vld [vmem:[%s1516 + $0xb8] sm:$0xff]
    %v1541 = vld [vmem:[%s1516 + $0xc0] sm:$0xff]
    %v1542 = vld [vmem:[%s1516 + $0xc8] sm:$0xff]
    %v1543 = vld [vmem:[%s1516 + $0xd0] sm:$0xff]
    %v1544 = vld [vmem:[%s1516 + $0xd8] sm:$0xff]
    %v1545 = vld [vmem:[%s1516 + $0xe0] sm:$0xff]
    %v1546 = vld [vmem:[%s1516 + $0xe8] sm:$0xff]
    %v1547 = vld [vmem:[%s1516 + $0xf0] sm:$0xff]
    %v1548 = vld [vmem:[%s1516 + $0xf8] sm:$0xff]
    %s1549 = scalar_lea.vmem %s15, 1
    %v1550 = vld [vmem:[%s1549] sm:$0x1]
    %v1552 = vperm.slane %v1550, 0
    %1554 = vmatpush.msra.mxu0 %v1532
    %1555 = vmatpush.msra.mxu0 %v1531
    %1556 = vmatpush.msra.mxu0 %v1530
    %1557 = vmatpush.msra.mxu0 %v1529
    %1558 = vmatpush.msra.mxu0 %v1528
    %1559 = vmatpush.msra.mxu0 %v1527
    %1560 = vmatpush.msra.mxu0 %v1526
    %1561 = vmatpush.msra.mxu0 %v1525
    %1562 = vmatpush.msra.mxu0 %v1524
    %1563 = vmatpush.msra.mxu0 %v1523
    %1564 = vmatpush.msra.mxu0 %v1522
    %1565 = vmatpush.msra.mxu0 %v1521
    %1566 = vmatpush.msra.mxu0 %v1520
    %1567 = vmatpush.msra.mxu0 %v1519
    %1568 = vmatpush.msra.mxu0 %v1518
    %1569 = vmatpush.msra.mxu0 %v1517
    %1570 = vmatmul.f32.gmra.mxu0 %v1514
    %v1571 = vpop.f32.mrf.mxu0
    %v1572 = vadd.f32 %v1552, %v1571
    %1573 = vdwg.mxu0
    %1574 = vmatpush.msra.mxu0 %v1548
    %1575 = vmatpush.msra.mxu0 %v1547
    %1576 = vmatpush.msra.mxu0 %v1546
    %1577 = vmatpush.msra.mxu0 %v1545
    %1578 = vmatpush.msra.mxu0 %v1544
    %1579 = vmatpush.msra.mxu0 %v1543
    %1580 = vmatpush.msra.mxu0 %v1542
    %1581 = vmatpush.msra.mxu0 %v1541
    %1582 = vmatpush.msra.mxu0 %v1540
    %1583 = vmatpush.msra.mxu0 %v1539
    %1584 = vmatpush.msra.mxu0 %v1538
    %1585 = vmatpush.msra.mxu0 %v1537
    %1586 = vmatpush.msra.mxu0 %v1536
    %1587 = vmatpush.msra.mxu0 %v1535
    %1588 = vmatpush.msra.mxu0 %v1534
    %1589 = vmatpush.msra.mxu0 %v1533
    %1590 = vmatmul.f32.gmra.mxu0 %v1515
    %v1591 = vpop.f32.mrf.mxu0
    %v1592 = vadd.f32 %v1572, %v1591
    %1593 = vdwg.mxu0
    %v1594 = vadd.f32 %v1454, %v1592
    %s1595 = scalar_lea.vmem %s16, 1
    %v1596 = vld [vmem:[%s1595] sm:$0x1]
    %s1597 = scalar_lea.vmem %s17, 1
    %v1598 = vld [vmem:[%s1597] sm:$0x1]
    %v1599 = vsel %vm1424, %v1594, 0.0
    %1600 = vadd.xlane.f32.xlu0 %v1599
    %v1601 = vpop.xlane.xlu0 %1600
    %v1602 = vmul.f32 %v1601, %v711
    %v1603 = vsub.f32 %v1594, %v1602
    %v1604 = vmul.f32 %v1603, %v1603
    %v1605 = vsel %vm1424, %v1604, 0.0
    %1606 = vadd.xlane.f32.xlu0 %v1605
    %v1607 = vpop.xlane.xlu0 %1606
    %v1608 = vmul.f32 %v1607, %v711
    %v1609 = vadd.f32 %v1608, 1e-05
    %v1610 = vrsqrt.pop %v1609
    %v1611 = vmul.f32 %v1610, %v1609
    %v1612 = vmul.f32 %v1611, %v1610
    %v1613 = vmul.f32 0.5, %v1612
    %v1614 = vsub.f32 1.5, %v1613
    %v1615 = vmul.f32 %v1610, %v1614
    %vm1616 = vweird.f32 %v1609
    %vm1617 = vweird.f32 %v1610
    %vm1618 = vmor %vm1616, %vm1617
    %v1619 = vsel %vm1618, %v1610, %v1615
    %v1620 = vmul.f32 %v1603, %v1619
    %v1622 = vperm.slane %v1596, 0
    %v1624 = vmul.f32 %v1620, %v1622
    %v1626 = vperm.slane %v1598, 0
    %v1628 = vadd.f32 %v1624, %v1626
    %1629 = vst.msk [vmem:[#allocation2] sm:$0x3] %vm1424, %v1628
    // Predicated region
    $region74: #{transformer_forward.1} parent=1 // pred_check
      _
    $region75: #{transformer_forward.1} parent=1 // pred_check_branch
      %1631 = sbr.rel (0) target = $region77
    $region76: #{transformer_forward.1} parent=1 // pred_region
      %1633 = vsyncadd [#allocation3], 0
      %s1635 = sshll.u32 [#allocation2], 4
      %s1636 = int_to_ptr.vmem [resolvable:$true] %s1635
      %s1637 = sshll.u32 %s18, 4
      %s1638 = int_to_ptr.hbm [resolvable:$true] %s1637
      %1640 = dma.vmem_to_hbm [thread:$0]  %s1636, 32, %s1638, [#allocation3]
    $region77: #{transformer_forward.1} parent=1 // pred_fallthru
      _
    // Predicated region
    $region78: #{transformer_forward.1} parent=1 // pred_check
      _
    $region79: #{transformer_forward.1} parent=1 // pred_check_branch
      %1642 = sbr.rel (0) target = $region81
    $region80: #{transformer_forward.1} parent=1 // pred_region
      %1644 = dma.done [#allocation3], 32
    $region81: #{transformer_forward.1} parent=1 // pred_fallthru
      _
    %1645 = vsyncpa [#allocation3], 1

</llo_original>
